<compile_context>
chip_gen: v5e
topology: v5e:2x2
jax: 0.10.0
libtpu: 0.0.40
codegen_flags: <defaults>
</compile_context>

<pallas_src>
import jax
import jax.numpy as jnp
from jax.experimental import pallas as pl
from jax.experimental.pallas import tpu as pltpu


def _round_up(x, m):
    return (x + m - 1) // m * m


def absa_lstm_kernel(xt_ref, mask_ref, wx_ref, wh_ref, b_ref, wo_ref, bo_ref,
                     out_ref):
    """One batch tile.

    xt_ref:   (T*TB, Dw)  bf16, time-major rows (row = t*TB + b_local)
    mask_ref: (T*TB, 1)   f32, same row layout
    wx_ref:   (Dw, 4*Hp)  bf16  (gate order [i, f, g, o], each padded to Hp)
    wh_ref:   (Hp, 4*Hp)  bf16
    b_ref:    (1, 4*Hp)   f32
    wo_ref:   (Hp, Cp)    bf16
    bo_ref:   (1, Cp)     f32
    out_ref:  (TB, Cp)    f32  (lane-dense store)
    """
    rows = xt_ref.shape[0]
    Hp = wh_ref.shape[0]
    TB = out_ref.shape[0]
    T = rows // TB

    wh = wh_ref[...]

    # Hoisted input projection: a single MXU matmul covers all T time steps.
    zx = (jnp.dot(xt_ref[...], wx_ref[...],
                  preferred_element_type=jnp.float32)
          + b_ref[...])                                    # (T*TB, 4*Hp) f32

    # Hoisted mask broadcast: one broadcast_in_dim outside the loop.
    keep = jnp.broadcast_to(mask_ref[...], (rows, Hp))      # (T*TB, Hp) f32

    h = jnp.zeros((TB, Hp), jnp.float32)
    c = jnp.zeros((TB, Hp), jnp.float32)

    # T is static and small -> unrolled Python loop (all slices are static and
    # 8-sublane / 128-lane aligned).
    # TODO(synk): switch to lax.fori_loop carrying (h, c) if T becomes large.
    for t in range(T):
        r0 = t * TB
        z = zx[r0:r0 + TB, :] + jnp.dot(
            h.astype(jnp.bfloat16), wh, preferred_element_type=jnp.float32)

        # Hp is a multiple of 128 -> each gate slice is a whole lane-group.
        i_g = jax.nn.sigmoid(z[:, 0 * Hp:1 * Hp])
        f_g = jax.nn.sigmoid(z[:, 1 * Hp:2 * Hp])
        g_g = jnp.tanh(z[:, 2 * Hp:3 * Hp])
        o_g = jax.nn.sigmoid(z[:, 3 * Hp:4 * Hp])

        c_new = f_g * c + i_g * g_g
        h_new = o_g * jnp.tanh(c_new)

        m = keep[r0:r0 + TB, :] > 0.5
        h = jnp.where(m, h_new, h)
        c = jnp.where(m, c_new, c)

    # Lane-dense (TB, Cp) store; real (B, C) logits sliced out in the wrapper.
    out_ref[...] = (jnp.dot(h.astype(jnp.bfloat16), wo_ref[...],
                            preferred_element_type=jnp.float32)
                    + bo_ref[...])


def absa_lstm_forward(sent, target, lens, emb_matrix, wx, wh, b, wo, bo,
                      maxlen, *, batch_tile=8):
    """sent: (B, T) int32 token ids; target unused (matches PyTorch forward);
    lens: (B,) int32 valid lengths. Returns (B, num_class) float32 logits."""
    del target  # unused in the reference forward pass

    B, T = sent.shape
    assert T == maxlen
    Dw = emb_matrix.shape[1]
    H = wh.shape[0]
    C = wo.shape[1]

    TB = batch_tile                       # rows per grid step (multiple of 8)
    Bp = _round_up(max(B, TB), TB)        # padded batch
    Hp = _round_up(H, 128)                # hidden padded to full lane groups
    Cp = _round_up(C, 128)                # lane-dense classifier output
    nb = Bp // TB

    # ---- glue (plain JAX): embedding gather, mask, padding, layout ---------
    x = jnp.take(emb_matrix, sent, axis=0).astype(jnp.float32)   # (B, T, Dw)
    mask = (jnp.arange(T)[None, :] < lens[:, None]).astype(jnp.float32)

    x_p = jnp.zeros((Bp, T, Dw), jnp.float32).at[:B].set(x)
    m_p = jnp.zeros((Bp, T), jnp.float32).at[:B].set(mask)

    # time-major rows inside each batch tile: row = t*TB + b_local
    xt = (x_p.reshape(nb, TB, T, Dw).transpose(0, 2, 1, 3)
          .reshape(nb, T * TB, Dw).astype(jnp.bfloat16))
    mt = (m_p.reshape(nb, TB, T).transpose(0, 2, 1)
          .reshape(nb, T * TB, 1))

    # pad weights: each gate block padded H -> Hp, classifier padded C -> Cp;
    # padded rows/cols are zero so padded lanes never contaminate real lanes.
    wx_p = (jnp.zeros((Dw, 4, Hp), jnp.float32)
            .at[:, :, :H].set(wx.reshape(Dw, 4, H))
            .reshape(Dw, 4 * Hp).astype(jnp.bfloat16))
    wh_p = (jnp.zeros((Hp, 4, Hp), jnp.float32)
            .at[:H, :, :H].set(wh.reshape(H, 4, H))
            .reshape(Hp, 4 * Hp).astype(jnp.bfloat16))
    b_p = (jnp.zeros((1, 4, Hp), jnp.float32)
           .at[:, :, :H].set(b.reshape(1, 4, H))
           .reshape(1, 4 * Hp))
    wo_p = (jnp.zeros((Hp, Cp), jnp.float32)
            .at[:H, :C].set(wo).astype(jnp.bfloat16))
    bo_p = jnp.zeros((1, Cp), jnp.float32).at[:, :C].set(bo)

    # ---- Pallas kernel: recurrence + classifier ----------------------------
    out = pl.pallas_call(
        absa_lstm_kernel,
        out_shape=jax.ShapeDtypeStruct((Bp, Cp), jnp.float32),
        grid=(nb,),
        in_specs=[
            pl.BlockSpec((None, T * TB, Dw), lambda i: (i, 0, 0)),   # xt
            pl.BlockSpec((None, T * TB, 1), lambda i: (i, 0, 0)),    # mask
            pl.BlockSpec((Dw, 4 * Hp), lambda i: (0, 0)),            # Wx
            pl.BlockSpec((Hp, 4 * Hp), lambda i: (0, 0)),            # Wh
            pl.BlockSpec((1, 4 * Hp), lambda i: (0, 0)),             # b
            pl.BlockSpec((Hp, Cp), lambda i: (0, 0)),                # Wo
            pl.BlockSpec((1, Cp), lambda i: (0, 0)),                 # bo
        ],
        out_specs=pl.BlockSpec((TB, Cp), lambda i: (i, 0)),
        compiler_params=pltpu.CompilerParams(
            dimension_semantics=("parallel",)),
    )(xt, mt, wx_p, wh_p, b_p, wo_p, bo_p)

    return out[:B, :C]


def absa_lstm_reference(sent, lens, emb_matrix, wx, wh, b, wo, bo, maxlen):
    """Pure-JAX f32 reference matching the PyTorch forward pass."""
    B = sent.shape[0]
    H = wh.shape[0]
    x = jnp.take(emb_matrix, sent, axis=0).astype(jnp.float32)
    mask = (jnp.arange(maxlen)[None, :] < lens[:, None]).astype(jnp.float32)
    h = jnp.zeros((B, H), jnp.float32)
    c = jnp.zeros((B, H), jnp.float32)
    for t in range(maxlen):
        z = x[:, t, :] @ wx + h @ wh + b
        i_g = jax.nn.sigmoid(z[:, 0 * H:1 * H])
        f_g = jax.nn.sigmoid(z[:, 1 * H:2 * H])
        g_g = jnp.tanh(z[:, 2 * H:3 * H])
        o_g = jax.nn.sigmoid(z[:, 3 * H:4 * H])
        c_new = f_g * c + i_g * g_g
        h_new = o_g * jnp.tanh(c_new)
        m = mask[:, t][:, None]
        h = m * h_new + (1.0 - m) * h
        c = m * c_new + (1.0 - m) * c
    return h @ wo + bo


if __name__ == "__main__":
    # Small, deterministic configuration.
    num_word = 50
    dim_word = 32
    dim_hidden = 32
    num_classification = 3
    maxlen = 8
    batch = 4

    key = jax.random.PRNGKey(0)
    k_emb, k_wx, k_wh, k_b, k_wo, k_bo, k_sent, k_tgt = jax.random.split(key, 8)

    # Deterministic synthetic parameters (shapes implied by the module init).
    emb_matrix = jax.random.normal(k_emb, (num_word, dim_word), jnp.float32) * 0.1
    wx = jax.random.normal(k_wx, (dim_word, 4 * dim_hidden), jnp.float32) * 0.1
    wh = jax.random.normal(k_wh, (dim_hidden, 4 * dim_hidden), jnp.float32) * 0.1
    b = jax.random.normal(k_b, (1, 4 * dim_hidden), jnp.float32) * 0.1
    wo = jax.random.normal(k_wo, (dim_hidden, num_classification), jnp.float32) * 0.1
    bo = jax.random.normal(k_bo, (1, num_classification), jnp.float32) * 0.1

    # Inputs.
    sent = jax.random.randint(k_sent, (batch, maxlen), 0, num_word, jnp.int32)
    target = jax.random.randint(k_tgt, (batch,), 0, num_word, jnp.int32)
    lens = jnp.array([8, 5, 3, 8], dtype=jnp.int32)

    logits = absa_lstm_forward(sent, target, lens, emb_matrix, wx, wh, b, wo,
                               bo, maxlen)
    logits = jax.block_until_ready(logits)
    assert logits.shape == (batch, num_classification)

    # Correctness vs. f32 pure-JAX reference (bf16 MXU inputs -> loose tol).
    ref = absa_lstm_reference(sent, lens, emb_matrix, wx, wh, b, wo, bo, maxlen)
    assert jnp.allclose(logits, ref, atol=1e-2, rtol=1e-2), (
        f"max abs diff {jnp.max(jnp.abs(logits - ref))}")

    print("KERNEL_OK")
</pallas_src>

<mosaic_0001>
module attributes {stable_mosaic.version = 11 : i64} {
  func.func @absa_lstm_kernel(%arg0: i32, %arg1: memref<1x64x32xbf16, #tpu.memory_space<vmem>>, %arg2: memref<1x64x1xf32, #tpu.memory_space<vmem>>, %arg3: memref<32x512xbf16, #tpu.memory_space<vmem>>, %arg4: memref<128x512xbf16, #tpu.memory_space<vmem>>, %arg5: memref<1x512xf32, #tpu.memory_space<vmem>>, %arg6: memref<128x128xbf16, #tpu.memory_space<vmem>>, %arg7: memref<1x128xf32, #tpu.memory_space<vmem>>, %arg8: memref<8x128xf32, #tpu.memory_space<vmem>>) attributes {dimension_semantics = [#tpu.dimension_semantics<parallel>], iteration_bounds = array<i64: 1>, scalar_prefetch = 0 : i64, scratch_operands = 0 : i64, tpu.core_type = #tpu.core_type<tc>, window_params = [{transform_indices = @transform_0, window_bounds = array<i64: 1, 64, 32>}, {transform_indices = @transform_1, window_bounds = array<i64: 1, 64, 1>}, {pipeline_mode = #tpu.pipeline_mode<synchronous>, transform_indices = @transform_2, window_bounds = array<i64: 32, 512>}, {pipeline_mode = #tpu.pipeline_mode<synchronous>, transform_indices = @transform_3, window_bounds = array<i64: 128, 512>}, {pipeline_mode = #tpu.pipeline_mode<synchronous>, transform_indices = @transform_4, window_bounds = array<i64: 1, 512>}, {pipeline_mode = #tpu.pipeline_mode<synchronous>, transform_indices = @transform_5, window_bounds = array<i64: 128, 128>}, {pipeline_mode = #tpu.pipeline_mode<synchronous>, transform_indices = @transform_6, window_bounds = array<i64: 1, 128>}, {transform_indices = @transform_7, window_bounds = array<i64: 8, 128>}]} {
    %c0 = arith.constant 0 : index
    %c0_0 = arith.constant 0 : index
    %0 = vector.load %arg4[%c0, %c0_0] : memref<128x512xbf16, #tpu.memory_space<vmem>>, vector<128x512xbf16>
    %c0_1 = arith.constant 0 : index
    %c0_2 = arith.constant 0 : index
    %c0_3 = arith.constant 0 : index
    %1 = vector.load %arg1[%c0_1, %c0_2, %c0_3] : memref<1x64x32xbf16, #tpu.memory_space<vmem>>, vector<1x64x32xbf16>
    %2 = vector.shape_cast %1 : vector<1x64x32xbf16> to vector<64x32xbf16>
    %c0_4 = arith.constant 0 : index
    %c0_5 = arith.constant 0 : index
    %3 = vector.load %arg3[%c0_4, %c0_5] : memref<32x512xbf16, #tpu.memory_space<vmem>>, vector<32x512xbf16>
    %cst = arith.constant dense<0.000000e+00> : vector<64x512xf32>
    %4 = tpu.matmul %2, %3, %cst {dimension_numbers = #tpu.dot_dimension_numbers<[1], [0], [0], [1], [0, 0, 1, 1], [], []>} : vector<64x32xbf16>, vector<32x512xbf16>, vector<64x512xf32> -> vector<64x512xf32>
    %c0_6 = arith.constant 0 : index
    %c0_7 = arith.constant 0 : index
    %5 = vector.load %arg5[%c0_6, %c0_7] : memref<1x512xf32, #tpu.memory_space<vmem>>, vector<1x512xf32>
    %6 = vector.broadcast %5 : vector<1x512xf32> to vector<64x512xf32>
    %7 = arith.addf %4, %6 : vector<64x512xf32>
    %c0_8 = arith.constant 0 : index
    %c0_9 = arith.constant 0 : index
    %c0_10 = arith.constant 0 : index
    %8 = vector.load %arg2[%c0_8, %c0_9, %c0_10] : memref<1x64x1xf32, #tpu.memory_space<vmem>>, vector<1x64x1xf32>
    %9 = vector.shape_cast %8 : vector<1x64x1xf32> to vector<64x1xf32>
    %10 = vector.shape_cast %9 : vector<64x1xf32> to vector<64x1xf32>
    %11 = vector.broadcast %10 : vector<64x1xf32> to vector<64x128xf32>
    %cst_11 = arith.constant 0.000000e+00 : f32
    %12 = vector.broadcast %cst_11 : f32 to vector<8x128xf32>
    %cst_12 = arith.constant 0.000000e+00 : f32
    %13 = vector.broadcast %cst_12 : f32 to vector<8x128xf32>
    %14 = vector.extract_strided_slice %7 {offsets = [0, 0], sizes = [8, 512], strides = [1, 1]} : vector<64x512xf32> to vector<8x512xf32>
    %15 = arith.truncf %12 : vector<8x128xf32> to vector<8x128xbf16>
    %cst_13 = arith.constant dense<0.000000e+00> : vector<8x512xf32>
    %16 = tpu.matmul %15, %0, %cst_13 {dimension_numbers = #tpu.dot_dimension_numbers<[1], [0], [0], [1], [0, 0, 1, 1], [], []>} : vector<8x128xbf16>, vector<128x512xbf16>, vector<8x512xf32> -> vector<8x512xf32>
    %17 = arith.addf %14, %16 : vector<8x512xf32>
    %18 = vector.extract_strided_slice %17 {offsets = [0, 0], sizes = [8, 128], strides = [1, 1]} : vector<8x512xf32> to vector<8x128xf32>
    %19 = arith.negf %18 : vector<8x128xf32>
    %20 = math.exp %19 : vector<8x128xf32>
    %cst_14 = arith.constant 1.000000e+00 : f32
    %21 = vector.broadcast %cst_14 : f32 to vector<8x128xf32>
    %22 = arith.addf %21, %20 : vector<8x128xf32>
    %23 = arith.divf %21, %22 : vector<8x128xf32>
    %24 = vector.extract_strided_slice %17 {offsets = [0, 128], sizes = [8, 128], strides = [1, 1]} : vector<8x512xf32> to vector<8x128xf32>
    %25 = arith.negf %24 : vector<8x128xf32>
    %26 = math.exp %25 : vector<8x128xf32>
    %cst_15 = arith.constant 1.000000e+00 : f32
    %27 = vector.broadcast %cst_15 : f32 to vector<8x128xf32>
    %28 = arith.addf %27, %26 : vector<8x128xf32>
    %29 = arith.divf %27, %28 : vector<8x128xf32>
    %30 = vector.extract_strided_slice %17 {offsets = [0, 256], sizes = [8, 128], strides = [1, 1]} : vector<8x512xf32> to vector<8x128xf32>
    %31 = math.tanh %30 : vector<8x128xf32>
    %32 = vector.extract_strided_slice %17 {offsets = [0, 384], sizes = [8, 128], strides = [1, 1]} : vector<8x512xf32> to vector<8x128xf32>
    %33 = arith.negf %32 : vector<8x128xf32>
    %34 = math.exp %33 : vector<8x128xf32>
    %cst_16 = arith.constant 1.000000e+00 : f32
    %35 = vector.broadcast %cst_16 : f32 to vector<8x128xf32>
    %36 = arith.addf %35, %34 : vector<8x128xf32>
    %37 = arith.divf %35, %36 : vector<8x128xf32>
    %38 = arith.mulf %29, %13 : vector<8x128xf32>
    %39 = arith.mulf %23, %31 : vector<8x128xf32>
    %40 = arith.addf %38, %39 : vector<8x128xf32>
    %41 = math.tanh %40 : vector<8x128xf32>
    %42 = arith.mulf %37, %41 : vector<8x128xf32>
    %43 = vector.extract_strided_slice %11 {offsets = [0, 0], sizes = [8, 128], strides = [1, 1]} : vector<64x128xf32> to vector<8x128xf32>
    %cst_17 = arith.constant 5.000000e-01 : f32
    %44 = vector.broadcast %cst_17 : f32 to vector<8x128xf32>
    %45 = arith.cmpf ogt, %43, %44 : vector<8x128xf32>
    %46 = arith.select %45, %42, %12 : vector<8x128xi1>, vector<8x128xf32>
    %47 = arith.select %45, %40, %13 : vector<8x128xi1>, vector<8x128xf32>
    %48 = vector.extract_strided_slice %7 {offsets = [8, 0], sizes = [8, 512], strides = [1, 1]} : vector<64x512xf32> to vector<8x512xf32>
    %49 = arith.truncf %46 : vector<8x128xf32> to vector<8x128xbf16>
    %cst_18 = arith.constant dense<0.000000e+00> : vector<8x512xf32>
    %50 = tpu.matmul %49, %0, %cst_18 {dimension_numbers = #tpu.dot_dimension_numbers<[1], [0], [0], [1], [0, 0, 1, 1], [], []>} : vector<8x128xbf16>, vector<128x512xbf16>, vector<8x512xf32> -> vector<8x512xf32>
    %51 = arith.addf %48, %50 : vector<8x512xf32>
    %52 = vector.extract_strided_slice %51 {offsets = [0, 0], sizes = [8, 128], strides = [1, 1]} : vector<8x512xf32> to vector<8x128xf32>
    %53 = arith.negf %52 : vector<8x128xf32>
    %54 = math.exp %53 : vector<8x128xf32>
    %cst_19 = arith.constant 1.000000e+00 : f32
    %55 = vector.broadcast %cst_19 : f32 to vector<8x128xf32>
    %56 = arith.addf %55, %54 : vector<8x128xf32>
    %57 = arith.divf %55, %56 : vector<8x128xf32>
    %58 = vector.extract_strided_slice %51 {offsets = [0, 128], sizes = [8, 128], strides = [1, 1]} : vector<8x512xf32> to vector<8x128xf32>
    %59 = arith.negf %58 : vector<8x128xf32>
    %60 = math.exp %59 : vector<8x128xf32>
    %cst_20 = arith.constant 1.000000e+00 : f32
    %61 = vector.broadcast %cst_20 : f32 to vector<8x128xf32>
    %62 = arith.addf %61, %60 : vector<8x128xf32>
    %63 = arith.divf %61, %62 : vector<8x128xf32>
    %64 = vector.extract_strided_slice %51 {offsets = [0, 256], sizes = [8, 128], strides = [1, 1]} : vector<8x512xf32> to vector<8x128xf32>
    %65 = math.tanh %64 : vector<8x128xf32>
    %66 = vector.extract_strided_slice %51 {offsets = [0, 384], sizes = [8, 128], strides = [1, 1]} : vector<8x512xf32> to vector<8x128xf32>
    %67 = arith.negf %66 : vector<8x128xf32>
    %68 = math.exp %67 : vector<8x128xf32>
    %cst_21 = arith.constant 1.000000e+00 : f32
    %69 = vector.broadcast %cst_21 : f32 to vector<8x128xf32>
    %70 = arith.addf %69, %68 : vector<8x128xf32>
    %71 = arith.divf %69, %70 : vector<8x128xf32>
    %72 = arith.mulf %63, %47 : vector<8x128xf32>
    %73 = arith.mulf %57, %65 : vector<8x128xf32>
    %74 = arith.addf %72, %73 : vector<8x128xf32>
    %75 = math.tanh %74 : vector<8x128xf32>
    %76 = arith.mulf %71, %75 : vector<8x128xf32>
    %77 = vector.extract_strided_slice %11 {offsets = [8, 0], sizes = [8, 128], strides = [1, 1]} : vector<64x128xf32> to vector<8x128xf32>
    %cst_22 = arith.constant 5.000000e-01 : f32
    %78 = vector.broadcast %cst_22 : f32 to vector<8x128xf32>
    %79 = arith.cmpf ogt, %77, %78 : vector<8x128xf32>
    %80 = arith.select %79, %76, %46 : vector<8x128xi1>, vector<8x128xf32>
    %81 = arith.select %79, %74, %47 : vector<8x128xi1>, vector<8x128xf32>
    %82 = vector.extract_strided_slice %7 {offsets = [16, 0], sizes = [8, 512], strides = [1, 1]} : vector<64x512xf32> to vector<8x512xf32>
    %83 = arith.truncf %80 : vector<8x128xf32> to vector<8x128xbf16>
    %cst_23 = arith.constant dense<0.000000e+00> : vector<8x512xf32>
    %84 = tpu.matmul %83, %0, %cst_23 {dimension_numbers = #tpu.dot_dimension_numbers<[1], [0], [0], [1], [0, 0, 1, 1], [], []>} : vector<8x128xbf16>, vector<128x512xbf16>, vector<8x512xf32> -> vector<8x512xf32>
    %85 = arith.addf %82, %84 : vector<8x512xf32>
    %86 = vector.extract_strided_slice %85 {offsets = [0, 0], sizes = [8, 128], strides = [1, 1]} : vector<8x512xf32> to vector<8x128xf32>
    %87 = arith.negf %86 : vector<8x128xf32>
    %88 = math.exp %87 : vector<8x128xf32>
    %cst_24 = arith.constant 1.000000e+00 : f32
    %89 = vector.broadcast %cst_24 : f32 to vector<8x128xf32>
    %90 = arith.addf %89, %88 : vector<8x128xf32>
    %91 = arith.divf %89, %90 : vector<8x128xf32>
    %92 = vector.extract_strided_slice %85 {offsets = [0, 128], sizes = [8, 128], strides = [1, 1]} : vector<8x512xf32> to vector<8x128xf32>
    %93 = arith.negf %92 : vector<8x128xf32>
    %94 = math.exp %93 : vector<8x128xf32>
    %cst_25 = arith.constant 1.000000e+00 : f32
    %95 = vector.broadcast %cst_25 : f32 to vector<8x128xf32>
    %96 = arith.addf %95, %94 : vector<8x128xf32>
    %97 = arith.divf %95, %96 : vector<8x128xf32>
    %98 = vector.extract_strided_slice %85 {offsets = [0, 256], sizes = [8, 128], strides = [1, 1]} : vector<8x512xf32> to vector<8x128xf32>
    %99 = math.tanh %98 : vector<8x128xf32>
    %100 = vector.extract_strided_slice %85 {offsets = [0, 384], sizes = [8, 128], strides = [1, 1]} : vector<8x512xf32> to vector<8x128xf32>
    %101 = arith.negf %100 : vector<8x128xf32>
    %102 = math.exp %101 : vector<8x128xf32>
    %cst_26 = arith.constant 1.000000e+00 : f32
    %103 = vector.broadcast %cst_26 : f32 to vector<8x128xf32>
    %104 = arith.addf %103, %102 : vector<8x128xf32>
    %105 = arith.divf %103, %104 : vector<8x128xf32>
    %106 = arith.mulf %97, %81 : vector<8x128xf32>
    %107 = arith.mulf %91, %99 : vector<8x128xf32>
    %108 = arith.addf %106, %107 : vector<8x128xf32>
    %109 = math.tanh %108 : vector<8x128xf32>
    %110 = arith.mulf %105, %109 : vector<8x128xf32>
    %111 = vector.extract_strided_slice %11 {offsets = [16, 0], sizes = [8, 128], strides = [1, 1]} : vector<64x128xf32> to vector<8x128xf32>
    %cst_27 = arith.constant 5.000000e-01 : f32
    %112 = vector.broadcast %cst_27 : f32 to vector<8x128xf32>
    %113 = arith.cmpf ogt, %111, %112 : vector<8x128xf32>
    %114 = arith.select %113, %110, %80 : vector<8x128xi1>, vector<8x128xf32>
    %115 = arith.select %113, %108, %81 : vector<8x128xi1>, vector<8x128xf32>
    %116 = vector.extract_strided_slice %7 {offsets = [24, 0], sizes = [8, 512], strides = [1, 1]} : vector<64x512xf32> to vector<8x512xf32>
    %117 = arith.truncf %114 : vector<8x128xf32> to vector<8x128xbf16>
    %cst_28 = arith.constant dense<0.000000e+00> : vector<8x512xf32>
    %118 = tpu.matmul %117, %0, %cst_28 {dimension_numbers = #tpu.dot_dimension_numbers<[1], [0], [0], [1], [0, 0, 1, 1], [], []>} : vector<8x128xbf16>, vector<128x512xbf16>, vector<8x512xf32> -> vector<8x512xf32>
    %119 = arith.addf %116, %118 : vector<8x512xf32>
    %120 = vector.extract_strided_slice %119 {offsets = [0, 0], sizes = [8, 128], strides = [1, 1]} : vector<8x512xf32> to vector<8x128xf32>
    %121 = arith.negf %120 : vector<8x128xf32>
    %122 = math.exp %121 : vector<8x128xf32>
    %cst_29 = arith.constant 1.000000e+00 : f32
    %123 = vector.broadcast %cst_29 : f32 to vector<8x128xf32>
    %124 = arith.addf %123, %122 : vector<8x128xf32>
    %125 = arith.divf %123, %124 : vector<8x128xf32>
    %126 = vector.extract_strided_slice %119 {offsets = [0, 128], sizes = [8, 128], strides = [1, 1]} : vector<8x512xf32> to vector<8x128xf32>
    %127 = arith.negf %126 : vector<8x128xf32>
    %128 = math.exp %127 : vector<8x128xf32>
    %cst_30 = arith.constant 1.000000e+00 : f32
    %129 = vector.broadcast %cst_30 : f32 to vector<8x128xf32>
    %130 = arith.addf %129, %128 : vector<8x128xf32>
    %131 = arith.divf %129, %130 : vector<8x128xf32>
    %132 = vector.extract_strided_slice %119 {offsets = [0, 256], sizes = [8, 128], strides = [1, 1]} : vector<8x512xf32> to vector<8x128xf32>
    %133 = math.tanh %132 : vector<8x128xf32>
    %134 = vector.extract_strided_slice %119 {offsets = [0, 384], sizes = [8, 128], strides = [1, 1]} : vector<8x512xf32> to vector<8x128xf32>
    %135 = arith.negf %134 : vector<8x128xf32>
    %136 = math.exp %135 : vector<8x128xf32>
    %cst_31 = arith.constant 1.000000e+00 : f32
    %137 = vector.broadcast %cst_31 : f32 to vector<8x128xf32>
    %138 = arith.addf %137, %136 : vector<8x128xf32>
    %139 = arith.divf %137, %138 : vector<8x128xf32>
    %140 = arith.mulf %131, %115 : vector<8x128xf32>
    %141 = arith.mulf %125, %133 : vector<8x128xf32>
    %142 = arith.addf %140, %141 : vector<8x128xf32>
    %143 = math.tanh %142 : vector<8x128xf32>
    %144 = arith.mulf %139, %143 : vector<8x128xf32>
    %145 = vector.extract_strided_slice %11 {offsets = [24, 0], sizes = [8, 128], strides = [1, 1]} : vector<64x128xf32> to vector<8x128xf32>
    %cst_32 = arith.constant 5.000000e-01 : f32
    %146 = vector.broadcast %cst_32 : f32 to vector<8x128xf32>
    %147 = arith.cmpf ogt, %145, %146 : vector<8x128xf32>
    %148 = arith.select %147, %144, %114 : vector<8x128xi1>, vector<8x128xf32>
    %149 = arith.select %147, %142, %115 : vector<8x128xi1>, vector<8x128xf32>
    %150 = vector.extract_strided_slice %7 {offsets = [32, 0], sizes = [8, 512], strides = [1, 1]} : vector<64x512xf32> to vector<8x512xf32>
    %151 = arith.truncf %148 : vector<8x128xf32> to vector<8x128xbf16>
    %cst_33 = arith.constant dense<0.000000e+00> : vector<8x512xf32>
    %152 = tpu.matmul %151, %0, %cst_33 {dimension_numbers = #tpu.dot_dimension_numbers<[1], [0], [0], [1], [0, 0, 1, 1], [], []>} : vector<8x128xbf16>, vector<128x512xbf16>, vector<8x512xf32> -> vector<8x512xf32>
    %153 = arith.addf %150, %152 : vector<8x512xf32>
    %154 = vector.extract_strided_slice %153 {offsets = [0, 0], sizes = [8, 128], strides = [1, 1]} : vector<8x512xf32> to vector<8x128xf32>
    %155 = arith.negf %154 : vector<8x128xf32>
    %156 = math.exp %155 : vector<8x128xf32>
    %cst_34 = arith.constant 1.000000e+00 : f32
    %157 = vector.broadcast %cst_34 : f32 to vector<8x128xf32>
    %158 = arith.addf %157, %156 : vector<8x128xf32>
    %159 = arith.divf %157, %158 : vector<8x128xf32>
    %160 = vector.extract_strided_slice %153 {offsets = [0, 128], sizes = [8, 128], strides = [1, 1]} : vector<8x512xf32> to vector<8x128xf32>
    %161 = arith.negf %160 : vector<8x128xf32>
    %162 = math.exp %161 : vector<8x128xf32>
    %cst_35 = arith.constant 1.000000e+00 : f32
    %163 = vector.broadcast %cst_35 : f32 to vector<8x128xf32>
    %164 = arith.addf %163, %162 : vector<8x128xf32>
    %165 = arith.divf %163, %164 : vector<8x128xf32>
    %166 = vector.extract_strided_slice %153 {offsets = [0, 256], sizes = [8, 128], strides = [1, 1]} : vector<8x512xf32> to vector<8x128xf32>
    %167 = math.tanh %166 : vector<8x128xf32>
    %168 = vector.extract_strided_slice %153 {offsets = [0, 384], sizes = [8, 128], strides = [1, 1]} : vector<8x512xf32> to vector<8x128xf32>
    %169 = arith.negf %168 : vector<8x128xf32>
    %170 = math.exp %169 : vector<8x128xf32>
    %cst_36 = arith.constant 1.000000e+00 : f32
    %171 = vector.broadcast %cst_36 : f32 to vector<8x128xf32>
    %172 = arith.addf %171, %170 : vector<8x128xf32>
    %173 = arith.divf %171, %172 : vector<8x128xf32>
    %174 = arith.mulf %165, %149 : vector<8x128xf32>
    %175 = arith.mulf %159, %167 : vector<8x128xf32>
    %176 = arith.addf %174, %175 : vector<8x128xf32>
    %177 = math.tanh %176 : vector<8x128xf32>
    %178 = arith.mulf %173, %177 : vector<8x128xf32>
    %179 = vector.extract_strided_slice %11 {offsets = [32, 0], sizes = [8, 128], strides = [1, 1]} : vector<64x128xf32> to vector<8x128xf32>
    %cst_37 = arith.constant 5.000000e-01 : f32
    %180 = vector.broadcast %cst_37 : f32 to vector<8x128xf32>
    %181 = arith.cmpf ogt, %179, %180 : vector<8x128xf32>
    %182 = arith.select %181, %178, %148 : vector<8x128xi1>, vector<8x128xf32>
    %183 = arith.select %181, %176, %149 : vector<8x128xi1>, vector<8x128xf32>
    %184 = vector.extract_strided_slice %7 {offsets = [40, 0], sizes = [8, 512], strides = [1, 1]} : vector<64x512xf32> to vector<8x512xf32>
    %185 = arith.truncf %182 : vector<8x128xf32> to vector<8x128xbf16>
    %cst_38 = arith.constant dense<0.000000e+00> : vector<8x512xf32>
    %186 = tpu.matmul %185, %0, %cst_38 {dimension_numbers = #tpu.dot_dimension_numbers<[1], [0], [0], [1], [0, 0, 1, 1], [], []>} : vector<8x128xbf16>, vector<128x512xbf16>, vector<8x512xf32> -> vector<8x512xf32>
    %187 = arith.addf %184, %186 : vector<8x512xf32>
    %188 = vector.extract_strided_slice %187 {offsets = [0, 0], sizes = [8, 128], strides = [1, 1]} : vector<8x512xf32> to vector<8x128xf32>
    %189 = arith.negf %188 : vector<8x128xf32>
    %190 = math.exp %189 : vector<8x128xf32>
    %cst_39 = arith.constant 1.000000e+00 : f32
    %191 = vector.broadcast %cst_39 : f32 to vector<8x128xf32>
    %192 = arith.addf %191, %190 : vector<8x128xf32>
    %193 = arith.divf %191, %192 : vector<8x128xf32>
    %194 = vector.extract_strided_slice %187 {offsets = [0, 128], sizes = [8, 128], strides = [1, 1]} : vector<8x512xf32> to vector<8x128xf32>
    %195 = arith.negf %194 : vector<8x128xf32>
    %196 = math.exp %195 : vector<8x128xf32>
    %cst_40 = arith.constant 1.000000e+00 : f32
    %197 = vector.broadcast %cst_40 : f32 to vector<8x128xf32>
    %198 = arith.addf %197, %196 : vector<8x128xf32>
    %199 = arith.divf %197, %198 : vector<8x128xf32>
    %200 = vector.extract_strided_slice %187 {offsets = [0, 256], sizes = [8, 128], strides = [1, 1]} : vector<8x512xf32> to vector<8x128xf32>
    %201 = math.tanh %200 : vector<8x128xf32>
    %202 = vector.extract_strided_slice %187 {offsets = [0, 384], sizes = [8, 128], strides = [1, 1]} : vector<8x512xf32> to vector<8x128xf32>
    %203 = arith.negf %202 : vector<8x128xf32>
    %204 = math.exp %203 : vector<8x128xf32>
    %cst_41 = arith.constant 1.000000e+00 : f32
    %205 = vector.broadcast %cst_41 : f32 to vector<8x128xf32>
    %206 = arith.addf %205, %204 : vector<8x128xf32>
    %207 = arith.divf %205, %206 : vector<8x128xf32>
    %208 = arith.mulf %199, %183 : vector<8x128xf32>
    %209 = arith.mulf %193, %201 : vector<8x128xf32>
    %210 = arith.addf %208, %209 : vector<8x128xf32>
    %211 = math.tanh %210 : vector<8x128xf32>
    %212 = arith.mulf %207, %211 : vector<8x128xf32>
    %213 = vector.extract_strided_slice %11 {offsets = [40, 0], sizes = [8, 128], strides = [1, 1]} : vector<64x128xf32> to vector<8x128xf32>
    %cst_42 = arith.constant 5.000000e-01 : f32
    %214 = vector.broadcast %cst_42 : f32 to vector<8x128xf32>
    %215 = arith.cmpf ogt, %213, %214 : vector<8x128xf32>
    %216 = arith.select %215, %212, %182 : vector<8x128xi1>, vector<8x128xf32>
    %217 = arith.select %215, %210, %183 : vector<8x128xi1>, vector<8x128xf32>
    %218 = vector.extract_strided_slice %7 {offsets = [48, 0], sizes = [8, 512], strides = [1, 1]} : vector<64x512xf32> to vector<8x512xf32>
    %219 = arith.truncf %216 : vector<8x128xf32> to vector<8x128xbf16>
    %cst_43 = arith.constant dense<0.000000e+00> : vector<8x512xf32>
    %220 = tpu.matmul %219, %0, %cst_43 {dimension_numbers = #tpu.dot_dimension_numbers<[1], [0], [0], [1], [0, 0, 1, 1], [], []>} : vector<8x128xbf16>, vector<128x512xbf16>, vector<8x512xf32> -> vector<8x512xf32>
    %221 = arith.addf %218, %220 : vector<8x512xf32>
    %222 = vector.extract_strided_slice %221 {offsets = [0, 0], sizes = [8, 128], strides = [1, 1]} : vector<8x512xf32> to vector<8x128xf32>
    %223 = arith.negf %222 : vector<8x128xf32>
    %224 = math.exp %223 : vector<8x128xf32>
    %cst_44 = arith.constant 1.000000e+00 : f32
    %225 = vector.broadcast %cst_44 : f32 to vector<8x128xf32>
    %226 = arith.addf %225, %224 : vector<8x128xf32>
    %227 = arith.divf %225, %226 : vector<8x128xf32>
    %228 = vector.extract_strided_slice %221 {offsets = [0, 128], sizes = [8, 128], strides = [1, 1]} : vector<8x512xf32> to vector<8x128xf32>
    %229 = arith.negf %228 : vector<8x128xf32>
    %230 = math.exp %229 : vector<8x128xf32>
    %cst_45 = arith.constant 1.000000e+00 : f32
    %231 = vector.broadcast %cst_45 : f32 to vector<8x128xf32>
    %232 = arith.addf %231, %230 : vector<8x128xf32>
    %233 = arith.divf %231, %232 : vector<8x128xf32>
    %234 = vector.extract_strided_slice %221 {offsets = [0, 256], sizes = [8, 128], strides = [1, 1]} : vector<8x512xf32> to vector<8x128xf32>
    %235 = math.tanh %234 : vector<8x128xf32>
    %236 = vector.extract_strided_slice %221 {offsets = [0, 384], sizes = [8, 128], strides = [1, 1]} : vector<8x512xf32> to vector<8x128xf32>
    %237 = arith.negf %236 : vector<8x128xf32>
    %238 = math.exp %237 : vector<8x128xf32>
    %cst_46 = arith.constant 1.000000e+00 : f32
    %239 = vector.broadcast %cst_46 : f32 to vector<8x128xf32>
    %240 = arith.addf %239, %238 : vector<8x128xf32>
    %241 = arith.divf %239, %240 : vector<8x128xf32>
    %242 = arith.mulf %233, %217 : vector<8x128xf32>
    %243 = arith.mulf %227, %235 : vector<8x128xf32>
    %244 = arith.addf %242, %243 : vector<8x128xf32>
    %245 = math.tanh %244 : vector<8x128xf32>
    %246 = arith.mulf %241, %245 : vector<8x128xf32>
    %247 = vector.extract_strided_slice %11 {offsets = [48, 0], sizes = [8, 128], strides = [1, 1]} : vector<64x128xf32> to vector<8x128xf32>
    %cst_47 = arith.constant 5.000000e-01 : f32
    %248 = vector.broadcast %cst_47 : f32 to vector<8x128xf32>
    %249 = arith.cmpf ogt, %247, %248 : vector<8x128xf32>
    %250 = arith.select %249, %246, %216 : vector<8x128xi1>, vector<8x128xf32>
    %251 = arith.select %249, %244, %217 : vector<8x128xi1>, vector<8x128xf32>
    %252 = vector.extract_strided_slice %7 {offsets = [56, 0], sizes = [8, 512], strides = [1, 1]} : vector<64x512xf32> to vector<8x512xf32>
    %253 = arith.truncf %250 : vector<8x128xf32> to vector<8x128xbf16>
    %cst_48 = arith.constant dense<0.000000e+00> : vector<8x512xf32>
    %254 = tpu.matmul %253, %0, %cst_48 {dimension_numbers = #tpu.dot_dimension_numbers<[1], [0], [0], [1], [0, 0, 1, 1], [], []>} : vector<8x128xbf16>, vector<128x512xbf16>, vector<8x512xf32> -> vector<8x512xf32>
    %255 = arith.addf %252, %254 : vector<8x512xf32>
    %256 = vector.extract_strided_slice %255 {offsets = [0, 0], sizes = [8, 128], strides = [1, 1]} : vector<8x512xf32> to vector<8x128xf32>
    %257 = arith.negf %256 : vector<8x128xf32>
    %258 = math.exp %257 : vector<8x128xf32>
    %cst_49 = arith.constant 1.000000e+00 : f32
    %259 = vector.broadcast %cst_49 : f32 to vector<8x128xf32>
    %260 = arith.addf %259, %258 : vector<8x128xf32>
    %261 = arith.divf %259, %260 : vector<8x128xf32>
    %262 = vector.extract_strided_slice %255 {offsets = [0, 128], sizes = [8, 128], strides = [1, 1]} : vector<8x512xf32> to vector<8x128xf32>
    %263 = arith.negf %262 : vector<8x128xf32>
    %264 = math.exp %263 : vector<8x128xf32>
    %cst_50 = arith.constant 1.000000e+00 : f32
    %265 = vector.broadcast %cst_50 : f32 to vector<8x128xf32>
    %266 = arith.addf %265, %264 : vector<8x128xf32>
    %267 = arith.divf %265, %266 : vector<8x128xf32>
    %268 = vector.extract_strided_slice %255 {offsets = [0, 256], sizes = [8, 128], strides = [1, 1]} : vector<8x512xf32> to vector<8x128xf32>
    %269 = math.tanh %268 : vector<8x128xf32>
    %270 = vector.extract_strided_slice %255 {offsets = [0, 384], sizes = [8, 128], strides = [1, 1]} : vector<8x512xf32> to vector<8x128xf32>
    %271 = arith.negf %270 : vector<8x128xf32>
    %272 = math.exp %271 : vector<8x128xf32>
    %cst_51 = arith.constant 1.000000e+00 : f32
    %273 = vector.broadcast %cst_51 : f32 to vector<8x128xf32>
    %274 = arith.addf %273, %272 : vector<8x128xf32>
    %275 = arith.divf %273, %274 : vector<8x128xf32>
    %276 = arith.mulf %267, %251 : vector<8x128xf32>
    %277 = arith.mulf %261, %269 : vector<8x128xf32>
    %278 = arith.addf %276, %277 : vector<8x128xf32>
    %279 = math.tanh %278 : vector<8x128xf32>
    %280 = arith.mulf %275, %279 : vector<8x128xf32>
    %281 = vector.extract_strided_slice %11 {offsets = [56, 0], sizes = [8, 128], strides = [1, 1]} : vector<64x128xf32> to vector<8x128xf32>
    %cst_52 = arith.constant 5.000000e-01 : f32
    %282 = vector.broadcast %cst_52 : f32 to vector<8x128xf32>
    %283 = arith.cmpf ogt, %281, %282 : vector<8x128xf32>
    %284 = arith.select %283, %280, %250 : vector<8x128xi1>, vector<8x128xf32>
    %285 = arith.truncf %284 : vector<8x128xf32> to vector<8x128xbf16>
    %c0_53 = arith.constant 0 : index
    %c0_54 = arith.constant 0 : index
    %286 = vector.load %arg6[%c0_53, %c0_54] : memref<128x128xbf16, #tpu.memory_space<vmem>>, vector<128x128xbf16>
    %cst_55 = arith.constant dense<0.000000e+00> : vector<8x128xf32>
    %287 = tpu.matmul %285, %286, %cst_55 {dimension_numbers = #tpu.dot_dimension_numbers<[1], [0], [0], [1], [0, 0, 1, 1], [], []>} : vector<8x128xbf16>, vector<128x128xbf16>, vector<8x128xf32> -> vector<8x128xf32>
    %c0_56 = arith.constant 0 : index
    %c0_57 = arith.constant 0 : index
    %288 = vector.load %arg7[%c0_56, %c0_57] : memref<1x128xf32, #tpu.memory_space<vmem>>, vector<1x128xf32>
    %289 = vector.broadcast %288 : vector<1x128xf32> to vector<8x128xf32>
    %290 = arith.addf %287, %289 : vector<8x128xf32>
    %c0_58 = arith.constant 0 : index
    %c0_59 = arith.constant 0 : index
    %291 = vector.load %arg8[%c0_58, %c0_59] : memref<8x128xf32, #tpu.memory_space<vmem>>, vector<8x128xf32>
    tpu.vector_store %arg8[%c0_58, %c0_59], %290 {strides = array<i32>} : memref<8x128xf32, #tpu.memory_space<vmem>>, vector<8x128xf32>,
    return
  }
  func.func @transform_0(%arg0: i32) -> (i32, i32, i32) {
    %c0_i32 = arith.constant 0 : i32
    %c0_i32_0 = arith.constant 0 : i32
    %c0_i32_1 = arith.constant 0 : i32
    return %arg0, %c0_i32, %c0_i32_0 : i32, i32, i32
  }
  func.func @transform_1(%arg0: i32) -> (i32, i32, i32) {
    %c0_i32 = arith.constant 0 : i32
    %c0_i32_0 = arith.constant 0 : i32
    %c0_i32_1 = arith.constant 0 : i32
    return %arg0, %c0_i32, %c0_i32_0 : i32, i32, i32
  }
  func.func @transform_2(%arg0: i32) -> (i32, i32) {
    %c0_i32 = arith.constant 0 : i32
    %c0_i32_0 = arith.constant 0 : i32
    %c0_i32_1 = arith.constant 0 : i32
    return %c0_i32, %c0_i32_0 : i32, i32
  }
  func.func @transform_3(%arg0: i32) -> (i32, i32) {
    %c0_i32 = arith.constant 0 : i32
    %c0_i32_0 = arith.constant 0 : i32
    %c0_i32_1 = arith.constant 0 : i32
    return %c0_i32, %c0_i32_0 : i32, i32
  }
  func.func @transform_4(%arg0: i32) -> (i32, i32) {
    %c0_i32 = arith.constant 0 : i32
    %c0_i32_0 = arith.constant 0 : i32
    %c0_i32_1 = arith.constant 0 : i32
    return %c0_i32, %c0_i32_0 : i32, i32
  }
  func.func @transform_5(%arg0: i32) -> (i32, i32) {
    %c0_i32 = arith.constant 0 : i32
    %c0_i32_0 = arith.constant 0 : i32
    %c0_i32_1 = arith.constant 0 : i32
    return %c0_i32, %c0_i32_0 : i32, i32
  }
  func.func @transform_6(%arg0: i32) -> (i32, i32) {
    %c0_i32 = arith.constant 0 : i32
    %c0_i32_0 = arith.constant 0 : i32
    %c0_i32_1 = arith.constant 0 : i32
    return %c0_i32, %c0_i32_0 : i32, i32
  }
  func.func @transform_7(%arg0: i32) -> (i32, i32) {
    %c0_i32 = arith.constant 0 : i32
    %c0_i32_0 = arith.constant 0 : i32
    return %arg0, %c0_i32 : i32, i32
  }
}

</mosaic_0001>

<llo_original>
// kernel: tpu_custom_call.1
$region0: #{tpu_custom_call.1}
  #allocation0 [shape = 'u32[]', space=smem, size = 0x4, offset = 0x4, fixed_abs, tag = 'smem constant byte address 0x4 - core index']
  #allocation1 [shape = 'u32[72,128]{1,0:T(1,128)}', space=vmem, size = 0x9000, scoped, tag = 'internal scratch']
  %s0 = inlined_call_operand.vmem [shape: bf16[1,64,32], index: 0, kind: input, shape index: {}]
  %s1 = inlined_call_operand.vmem [shape: f32[1,64,1], index: 1, kind: input, shape index: {}]
  %s2 = inlined_call_operand.vmem [shape: bf16[32,512], index: 2, kind: input, shape index: {}]
  %s3 = inlined_call_operand.hbm [shape: bf16[128,512], index: 3, kind: input, shape index: {}]
  %s4 = inlined_call_operand.vmem [shape: f32[1,512], index: 4, kind: input, shape index: {}]
  %s5 = inlined_call_operand.hbm [shape: bf16[128,128], index: 5, kind: input, shape index: {}]
  %s6 = inlined_call_operand.vmem [shape: f32[1,128], index: 6, kind: input, shape index: {}]
  %s7 = inlined_call_operand.hbm [shape: f32[8,128], index: 7, kind: output, shape index: {}]
  %s8 = sld [smem:[#allocation0]]
  $region46: #{tpu_custom_call.1} parent=0
    _
  %s10 = ssub.s32 1, %s8
  %s11 = scalar_select 0, %s10, %s8
  $region1: #{tpu_custom_call.1} parent=0
    #allocation2 [shape = 'u8[131072]{0}', space=vmem, size = 0x20000, scoped, tag = 'input window, operand 3, single buffered']
    #allocation3 [shape = 's32[1]{0}', space=sflag, size = 0x4, scoped, tag = 'scoped memory for tpu_custom_call.1']
    #allocation4 [shape = 's32[1]{0}', space=sflag, size = 0x4, scoped, tag = 'scoped memory for tpu_custom_call.1']
    #allocation5 [shape = 'u8[32768]{0}', space=vmem, size = 0x8000, scoped, tag = 'input window, operand 5, single buffered']
    #allocation6 [shape = 's32[1]{0}', space=sflag, size = 0x4, scoped, tag = 'scoped memory for tpu_custom_call.1']
    #allocation7 [shape = 'u8[4096]{0}', space=vmem, size = 0x1000, scoped, tag = 'output window, operand 0, single buffered']
    %12 = vsyncpa [#allocation3], 0
    %13 = vsyncpa [#allocation6], 0
    %14 = vsyncpa [#allocation4], 0
    // Predicated region
    $region2: #{tpu_custom_call.1} parent=1 // pred_check
      _
    $region3: #{tpu_custom_call.1} parent=1 // pred_check_branch
      %16 = sbr.rel (0) target = $region5
    $region4: #{tpu_custom_call.1} parent=1 // pred_region
      _
    $region5: #{tpu_custom_call.1} parent=1 // pred_fallthru
      _
    // Predicated region
    $region6: #{tpu_custom_call.1} parent=1 // pred_check
      _
    $region7: #{tpu_custom_call.1} parent=1 // pred_check_branch
      %18 = sbr.rel (0) target = $region9
    $region8: #{tpu_custom_call.1} parent=1 // pred_region
      _
    $region9: #{tpu_custom_call.1} parent=1 // pred_fallthru
      _
    // Predicated region
    $region10: #{tpu_custom_call.1} parent=1 // pred_check
      _
    $region11: #{tpu_custom_call.1} parent=1 // pred_check_branch
      %20 = sbr.rel (0) target = $region13
    $region12: #{tpu_custom_call.1} parent=1 // pred_region
      _
    $region13: #{tpu_custom_call.1} parent=1 // pred_fallthru
      _
    // Predicated region
    $region14: #{tpu_custom_call.1} parent=1 // pred_check
      _
    $region15: #{tpu_custom_call.1} parent=1 // pred_check_branch
      %22 = sbr.rel (0) target = $region17
    $region16: #{tpu_custom_call.1} parent=1 // pred_region
      %24 = vsyncadd [#allocation3], 0
      %s25 = sshll.u32 %s3, 4
      %s26 = int_to_ptr.hbm [resolvable:$true] %s25
      %s27 = sshll.u32 [#allocation2], 4
      %s28 = int_to_ptr.vmem [resolvable:$true] %s27
      %33 = dma.hbm_to_vmem [thread:$0]  %s26, 4096, %s28, [#allocation3], 256, 256, 16
    $region17: #{tpu_custom_call.1} parent=1 // pred_fallthru
      _
    // Predicated region
    $region18: #{tpu_custom_call.1} parent=1 // pred_check
      _
    $region19: #{tpu_custom_call.1} parent=1 // pred_check_branch
      %35 = sbr.rel (0) target = $region21
    $region20: #{tpu_custom_call.1} parent=1 // pred_region
      _
    $region21: #{tpu_custom_call.1} parent=1 // pred_fallthru
      _
    // Predicated region
    $region22: #{tpu_custom_call.1} parent=1 // pred_check
      _
    $region23: #{tpu_custom_call.1} parent=1 // pred_check_branch
      %37 = sbr.rel (0) target = $region25
    $region24: #{tpu_custom_call.1} parent=1 // pred_region
      %39 = vsyncadd [#allocation6], 0
      %s40 = sshll.u32 %s5, 4
      %s41 = int_to_ptr.hbm [resolvable:$true] %s40
      %s42 = sshll.u32 [#allocation5], 4
      %s43 = int_to_ptr.vmem [resolvable:$true] %s42
      %48 = dma.hbm_to_vmem [thread:$0]  %s41, 1024, %s43, [#allocation6], 64, 64, 4
    $region25: #{tpu_custom_call.1} parent=1 // pred_fallthru
      _
    // Predicated region
    $region26: #{tpu_custom_call.1} parent=1 // pred_check
      _
    $region27: #{tpu_custom_call.1} parent=1 // pred_check_branch
      %50 = sbr.rel (0) target = $region29
    $region28: #{tpu_custom_call.1} parent=1 // pred_region
      _
    $region29: #{tpu_custom_call.1} parent=1 // pred_fallthru
      _
    // Predicated region
    $region30: #{tpu_custom_call.1} parent=1 // pred_check
      _
    $region31: #{tpu_custom_call.1} parent=1 // pred_check_branch
      %52 = sbr.rel (0) target = $region33
    $region32: #{tpu_custom_call.1} parent=1 // pred_region
      %54 = dma.done [#allocation3], 4096
    $region33: #{tpu_custom_call.1} parent=1 // pred_fallthru
      _
    // Predicated region
    $region34: #{tpu_custom_call.1} parent=1 // pred_check
      _
    $region35: #{tpu_custom_call.1} parent=1 // pred_check_branch
      %56 = sbr.rel (0) target = $region37
    $region36: #{tpu_custom_call.1} parent=1 // pred_region
      %58 = dma.done [#allocation6], 1024
    $region37: #{tpu_custom_call.1} parent=1 // pred_fallthru
      _
    %v60 = vld [vmem:[#allocation2] sm:$0xff]
    %v61 = vld [vmem:[#allocation2 + $0x8] sm:$0xff]
    %v62 = vld [vmem:[#allocation2 + $0x10] sm:$0xff]
    %v63 = vld [vmem:[#allocation2 + $0x18] sm:$0xff]
    %v64 = vld [vmem:[#allocation2 + $0x20] sm:$0xff]
    %v65 = vld [vmem:[#allocation2 + $0x28] sm:$0xff]
    %v66 = vld [vmem:[#allocation2 + $0x30] sm:$0xff]
    %v67 = vld [vmem:[#allocation2 + $0x38] sm:$0xff]
    %v68 = vld [vmem:[#allocation2 + $0x40] sm:$0xff]
    %v69 = vld [vmem:[#allocation2 + $0x48] sm:$0xff]
    %v70 = vld [vmem:[#allocation2 + $0x50] sm:$0xff]
    %v71 = vld [vmem:[#allocation2 + $0x58] sm:$0xff]
    %v72 = vld [vmem:[#allocation2 + $0x60] sm:$0xff]
    %v73 = vld [vmem:[#allocation2 + $0x68] sm:$0xff]
    %v74 = vld [vmem:[#allocation2 + $0x70] sm:$0xff]
    %v75 = vld [vmem:[#allocation2 + $0x78] sm:$0xff]
    %v76 = vld [vmem:[#allocation2 + $0x80] sm:$0xff]
    %v77 = vld [vmem:[#allocation2 + $0x88] sm:$0xff]
    %v78 = vld [vmem:[#allocation2 + $0x90] sm:$0xff]
    %v79 = vld [vmem:[#allocation2 + $0x98] sm:$0xff]
    %v80 = vld [vmem:[#allocation2 + $0xa0] sm:$0xff]
    %v81 = vld [vmem:[#allocation2 + $0xa8] sm:$0xff]
    %v82 = vld [vmem:[#allocation2 + $0xb0] sm:$0xff]
    %v83 = vld [vmem:[#allocation2 + $0xb8] sm:$0xff]
    %v84 = vld [vmem:[#allocation2 + $0xc0] sm:$0xff]
    %v85 = vld [vmem:[#allocation2 + $0xc8] sm:$0xff]
    %v86 = vld [vmem:[#allocation2 + $0xd0] sm:$0xff]
    %v87 = vld [vmem:[#allocation2 + $0xd8] sm:$0xff]
    %v88 = vld [vmem:[#allocation2 + $0xe0] sm:$0xff]
    %v89 = vld [vmem:[#allocation2 + $0xe8] sm:$0xff]
    %v90 = vld [vmem:[#allocation2 + $0xf0] sm:$0xff]
    %v91 = vld [vmem:[#allocation2 + $0xf8] sm:$0xff]
    %v92 = vld [vmem:[%s0] sm:$0xf]
    %v93 = vld [vmem:[%s0 + $0x4] sm:$0xf]
    %v94 = vld [vmem:[%s0 + $0x8] sm:$0xf]
    %v95 = vld [vmem:[%s0 + $0xc] sm:$0xf]
    %v96 = vld [vmem:[%s0 + $0x10] sm:$0xf]
    %v97 = vld [vmem:[%s0 + $0x14] sm:$0xf]
    %v98 = vld [vmem:[%s0 + $0x18] sm:$0xf]
    %v99 = vld [vmem:[%s0 + $0x1c] sm:$0xf]
    %v100 = vld [vmem:[%s2] sm:$0xff]
    %v101 = vld [vmem:[%s2 + $0x8] sm:$0xff]
    %v102 = vld [vmem:[%s2 + $0x10] sm:$0xff]
    %v103 = vld [vmem:[%s2 + $0x18] sm:$0xff]
    %v104 = vld [vmem:[%s2 + $0x20] sm:$0xff]
    %v105 = vld [vmem:[%s2 + $0x28] sm:$0xff]
    %v106 = vld [vmem:[%s2 + $0x30] sm:$0xff]
    %v107 = vld [vmem:[%s2 + $0x38] sm:$0xff]
    %v108 = vld [vmem:[%s4] sm:$0xf]
    %v110 = vperm.slane %v108, 0
    %v111 = vperm.slane %v108, 1
    %v112 = vperm.slane %v108, 2
    %v113 = vperm.slane %v108, 3
    %v126 = vunpack.c.l.b16 %v92
    %v127 = vunpack.c.l.b16 %v93
    %v128 = vunpack.c.l.b16 %v94
    %v129 = vunpack.c.l.b16 %v95
    %v130 = vunpack.c.l.b16 %v96
    %v131 = vunpack.c.l.b16 %v97
    %v132 = vunpack.c.l.b16 %v98
    %v133 = vunpack.c.l.b16 %v99
    %v134 = vpack.c.b16 %v127, %v126
    %v135 = vpack.c.b16 %v129, %v128
    %v136 = vpack.c.b16 %v131, %v130
    %v137 = vpack.c.b16 %v133, %v132
    %v146 = vunpack.c.l.b16 %v100
    %v147 = vunpack.c.h.b16 %v100
    %v148 = vunpack.c.l.b16 %v101
    %v149 = vunpack.c.h.b16 %v101
    %v150 = vunpack.c.l.b16 %v102
    %v151 = vunpack.c.h.b16 %v102
    %v152 = vunpack.c.l.b16 %v103
    %v153 = vunpack.c.h.b16 %v103
    %v154 = vunpack.c.l.b16 %v104
    %v155 = vunpack.c.h.b16 %v104
    %v156 = vunpack.c.l.b16 %v105
    %v157 = vunpack.c.h.b16 %v105
    %v158 = vunpack.c.l.b16 %v106
    %v159 = vunpack.c.h.b16 %v106
    %v160 = vunpack.c.l.b16 %v107
    %v161 = vunpack.c.h.b16 %v107
    %v162 = vpack.c.b16 %v150, %v146
    %v163 = vpack.c.b16 %v151, %v147
    %v164 = vpack.c.b16 %v152, %v148
    %v165 = vpack.c.b16 %v153, %v149
    %v166 = vpack.c.b16 %v158, %v154
    %v167 = vpack.c.b16 %v159, %v155
    %v168 = vpack.c.b16 %v160, %v156
    %v169 = vpack.c.b16 %v161, %v157
    %vm178 = vcmask 261120
    %v180 = vsel %vm178, %v134, 0
    %v183 = vsel %vm178, %v135, 0
    %v186 = vsel %vm178, %v136, 0
    %v189 = vsel %vm178, %v137, 0
    %191 = vmatpush.bf16.msra.mxu0 0
    %192 = vmatpush.bf16.msra.mxu0 0
    %193 = vmatpush.bf16.msra.mxu0 0
    %194 = vmatpush.bf16.msra.mxu0 0
    %195 = vmatpush.bf16.msra.mxu0 0
    %196 = vmatpush.bf16.msra.mxu0 0
    %197 = vmatpush.bf16.msra.mxu0 %v166
    %198 = vmatpush.bf16.msra.mxu0 %v162
    %199 = vmatmul.bf16.gmra.mxu0 %v180
    %v200 = vpop.f32.mrf.mxu0
    %v201 = vadd.f32 %v110, %v200
    %v202 = vpop.f32.mrf.mxu0
    %v203 = vadd.f32 %v110, %v202
    %204 = vmatmul.bf16.gmra.mxu0 %v183
    %v205 = vpop.f32.mrf.mxu0
    %v206 = vadd.f32 %v110, %v205
    %v207 = vpop.f32.mrf.mxu0
    %v208 = vadd.f32 %v110, %v207
    %209 = vmatmul.bf16.gmra.mxu0 %v186
    %v210 = vpop.f32.mrf.mxu0
    %v211 = vadd.f32 %v110, %v210
    %v212 = vpop.f32.mrf.mxu0
    %v213 = vadd.f32 %v110, %v212
    %214 = vmatmul.bf16.gmra.mxu0 %v189
    %v215 = vpop.f32.mrf.mxu0
    %v216 = vadd.f32 %v110, %v215
    %v217 = vpop.f32.mrf.mxu0
    %v218 = vadd.f32 %v110, %v217
    %219 = vdwg.mxu0
    %220 = vmatpush.bf16.msra.mxu0 0
    %221 = vmatpush.bf16.msra.mxu0 0
    %222 = vmatpush.bf16.msra.mxu0 0
    %223 = vmatpush.bf16.msra.mxu0 0
    %224 = vmatpush.bf16.msra.mxu0 0
    %225 = vmatpush.bf16.msra.mxu0 0
    %226 = vmatpush.bf16.msra.mxu0 %v167
    %227 = vmatpush.bf16.msra.mxu0 %v163
    %228 = vmatmul.bf16.gmra.mxu0 %v180
    %v229 = vpop.f32.mrf.mxu0
    %v230 = vadd.f32 %v111, %v229
    %v231 = vpop.f32.mrf.mxu0
    %v232 = vadd.f32 %v111, %v231
    %233 = vmatmul.bf16.gmra.mxu0 %v183
    %v234 = vpop.f32.mrf.mxu0
    %v235 = vadd.f32 %v111, %v234
    %v236 = vpop.f32.mrf.mxu0
    %v237 = vadd.f32 %v111, %v236
    %238 = vmatmul.bf16.gmra.mxu0 %v186
    %v239 = vpop.f32.mrf.mxu0
    %v240 = vadd.f32 %v111, %v239
    %v241 = vpop.f32.mrf.mxu0
    %v242 = vadd.f32 %v111, %v241
    %243 = vmatmul.bf16.gmra.mxu0 %v189
    %v244 = vpop.f32.mrf.mxu0
    %v245 = vadd.f32 %v111, %v244
    %v246 = vpop.f32.mrf.mxu0
    %v247 = vadd.f32 %v111, %v246
    %248 = vdwg.mxu0
    %249 = vmatpush.bf16.msra.mxu0 0
    %250 = vmatpush.bf16.msra.mxu0 0
    %251 = vmatpush.bf16.msra.mxu0 0
    %252 = vmatpush.bf16.msra.mxu0 0
    %253 = vmatpush.bf16.msra.mxu0 0
    %254 = vmatpush.bf16.msra.mxu0 0
    %255 = vmatpush.bf16.msra.mxu0 %v168
    %256 = vmatpush.bf16.msra.mxu0 %v164
    %257 = vmatmul.bf16.gmra.mxu0 %v180
    %v258 = vpop.f32.mrf.mxu0
    %v259 = vadd.f32 %v112, %v258
    %v260 = vpop.f32.mrf.mxu0
    %v261 = vadd.f32 %v112, %v260
    %262 = vmatmul.bf16.gmra.mxu0 %v183
    %v263 = vpop.f32.mrf.mxu0
    %v264 = vadd.f32 %v112, %v263
    %v265 = vpop.f32.mrf.mxu0
    %v266 = vadd.f32 %v112, %v265
    %267 = vmatmul.bf16.gmra.mxu0 %v186
    %v268 = vpop.f32.mrf.mxu0
    %v269 = vadd.f32 %v112, %v268
    %v270 = vpop.f32.mrf.mxu0
    %v271 = vadd.f32 %v112, %v270
    %272 = vmatmul.bf16.gmra.mxu0 %v189
    %v273 = vpop.f32.mrf.mxu0
    %v274 = vadd.f32 %v112, %v273
    %v275 = vpop.f32.mrf.mxu0
    %v276 = vadd.f32 %v112, %v275
    %277 = vdwg.mxu0
    %278 = vmatpush.bf16.msra.mxu0 0
    %279 = vmatpush.bf16.msra.mxu0 0
    %280 = vmatpush.bf16.msra.mxu0 0
    %281 = vmatpush.bf16.msra.mxu0 0
    %282 = vmatpush.bf16.msra.mxu0 0
    %283 = vmatpush.bf16.msra.mxu0 0
    %284 = vmatpush.bf16.msra.mxu0 %v169
    %285 = vmatpush.bf16.msra.mxu0 %v165
    %286 = vmatmul.bf16.gmra.mxu0 %v180
    %v287 = vpop.f32.mrf.mxu0
    %v288 = vadd.f32 %v113, %v287
    %v289 = vpop.f32.mrf.mxu0
    %v290 = vadd.f32 %v113, %v289
    %291 = vmatmul.bf16.gmra.mxu0 %v183
    %v292 = vpop.f32.mrf.mxu0
    %v293 = vadd.f32 %v113, %v292
    %v294 = vpop.f32.mrf.mxu0
    %v295 = vadd.f32 %v113, %v294
    %296 = vmatmul.bf16.gmra.mxu0 %v186
    %v297 = vpop.f32.mrf.mxu0
    %v298 = vadd.f32 %v113, %v297
    %v299 = vpop.f32.mrf.mxu0
    %v300 = vadd.f32 %v113, %v299
    %301 = vmatmul.bf16.gmra.mxu0 %v189
    %v302 = vpop.f32.mrf.mxu0
    %v303 = vadd.f32 %v113, %v302
    %v304 = vpop.f32.mrf.mxu0
    %v305 = vadd.f32 %v113, %v304
    %306 = vdwg.mxu0
    %v307 = vld [vmem:[%s1] sm:$0xff]
    %v308 = vld [vmem:[%s1 + $0x8] sm:$0xff]
    %v309 = vld [vmem:[%s1 + $0x10] sm:$0xff]
    %v310 = vld [vmem:[%s1 + $0x18] sm:$0xff]
    %v311 = vld [vmem:[%s1 + $0x20] sm:$0xff]
    %v312 = vld [vmem:[%s1 + $0x28] sm:$0xff]
    %v313 = vld [vmem:[%s1 + $0x30] sm:$0xff]
    %v314 = vld [vmem:[%s1 + $0x38] sm:$0xff]
    %v347 = vunpack.c.l.b16 %v60
    %v348 = vunpack.c.h.b16 %v60
    %v349 = vunpack.c.l.b16 %v61
    %v350 = vunpack.c.h.b16 %v61
    %v351 = vunpack.c.l.b16 %v62
    %v352 = vunpack.c.h.b16 %v62
    %v353 = vunpack.c.l.b16 %v63
    %v354 = vunpack.c.h.b16 %v63
    %v355 = vunpack.c.l.b16 %v64
    %v356 = vunpack.c.h.b16 %v64
    %v357 = vunpack.c.l.b16 %v65
    %v358 = vunpack.c.h.b16 %v65
    %v359 = vunpack.c.l.b16 %v66
    %v360 = vunpack.c.h.b16 %v66
    %v361 = vunpack.c.l.b16 %v67
    %v362 = vunpack.c.h.b16 %v67
    %v363 = vunpack.c.l.b16 %v68
    %v364 = vunpack.c.h.b16 %v68
    %v365 = vunpack.c.l.b16 %v69
    %v366 = vunpack.c.h.b16 %v69
    %v367 = vunpack.c.l.b16 %v70
    %v368 = vunpack.c.h.b16 %v70
    %v369 = vunpack.c.l.b16 %v71
    %v370 = vunpack.c.h.b16 %v71
    %v371 = vunpack.c.l.b16 %v72
    %v372 = vunpack.c.h.b16 %v72
    %v373 = vunpack.c.l.b16 %v73
    %v374 = vunpack.c.h.b16 %v73
    %v375 = vunpack.c.l.b16 %v74
    %v376 = vunpack.c.h.b16 %v74
    %v377 = vunpack.c.l.b16 %v75
    %v378 = vunpack.c.h.b16 %v75
    %v379 = vunpack.c.l.b16 %v76
    %v380 = vunpack.c.h.b16 %v76
    %v381 = vunpack.c.l.b16 %v77
    %v382 = vunpack.c.h.b16 %v77
    %v383 = vunpack.c.l.b16 %v78
    %v384 = vunpack.c.h.b16 %v78
    %v385 = vunpack.c.l.b16 %v79
    %v386 = vunpack.c.h.b16 %v79
    %v387 = vunpack.c.l.b16 %v80
    %v388 = vunpack.c.h.b16 %v80
    %v389 = vunpack.c.l.b16 %v81
    %v390 = vunpack.c.h.b16 %v81
    %v391 = vunpack.c.l.b16 %v82
    %v392 = vunpack.c.h.b16 %v82
    %v393 = vunpack.c.l.b16 %v83
    %v394 = vunpack.c.h.b16 %v83
    %v395 = vunpack.c.l.b16 %v84
    %v396 = vunpack.c.h.b16 %v84
    %v397 = vunpack.c.l.b16 %v85
    %v398 = vunpack.c.h.b16 %v85
    %v399 = vunpack.c.l.b16 %v86
    %v400 = vunpack.c.h.b16 %v86
    %v401 = vunpack.c.l.b16 %v87
    %v402 = vunpack.c.h.b16 %v87
    %v403 = vunpack.c.l.b16 %v88
    %v404 = vunpack.c.h.b16 %v88
    %v405 = vunpack.c.l.b16 %v89
    %v406 = vunpack.c.h.b16 %v89
    %v407 = vunpack.c.l.b16 %v90
    %v408 = vunpack.c.h.b16 %v90
    %v409 = vunpack.c.l.b16 %v91
    %v410 = vunpack.c.h.b16 %v91
    %v411 = vpack.c.b16 %v351, %v347
    %v412 = vpack.c.b16 %v352, %v348
    %v413 = vpack.c.b16 %v353, %v349
    %v414 = vpack.c.b16 %v354, %v350
    %v415 = vpack.c.b16 %v359, %v355
    %v416 = vpack.c.b16 %v360, %v356
    %v417 = vpack.c.b16 %v361, %v357
    %v418 = vpack.c.b16 %v362, %v358
    %v419 = vpack.c.b16 %v367, %v363
    %v420 = vpack.c.b16 %v368, %v364
    %v421 = vpack.c.b16 %v369, %v365
    %v422 = vpack.c.b16 %v370, %v366
    %v423 = vpack.c.b16 %v375, %v371
    %v424 = vpack.c.b16 %v376, %v372
    %v425 = vpack.c.b16 %v377, %v373
    %v426 = vpack.c.b16 %v378, %v374
    %v427 = vpack.c.b16 %v383, %v379
    %v428 = vpack.c.b16 %v384, %v380
    %v429 = vpack.c.b16 %v385, %v381
    %v430 = vpack.c.b16 %v386, %v382
    %v431 = vpack.c.b16 %v391, %v387
    %v432 = vpack.c.b16 %v392, %v388
    %v433 = vpack.c.b16 %v393, %v389
    %v434 = vpack.c.b16 %v394, %v390
    %v435 = vpack.c.b16 %v399, %v395
    %v436 = vpack.c.b16 %v400, %v396
    %v437 = vpack.c.b16 %v401, %v397
    %v438 = vpack.c.b16 %v402, %v398
    %v439 = vpack.c.b16 %v407, %v403
    %v440 = vpack.c.b16 %v408, %v404
    %v441 = vpack.c.b16 %v409, %v405
    %v442 = vpack.c.b16 %v410, %v406
    %475 = vmatpush.bf16.msra.mxu0 %v439
    %476 = vmatpush.bf16.msra.mxu0 %v435
    %477 = vmatpush.bf16.msra.mxu0 %v431
    %478 = vmatpush.bf16.msra.mxu0 %v427
    %479 = vmatpush.bf16.msra.mxu0 %v423
    %480 = vmatpush.bf16.msra.mxu0 %v419
    %481 = vmatpush.bf16.msra.mxu0 %v415
    %482 = vmatpush.bf16.msra.mxu0 %v411
    %483 = vmatmul.bf16.gmra.mxu0 0
    %v484 = vpop.f32.mrf.mxu0
    %v485 = vadd.f32 0.0, %v484
    %v486 = vpop.f32.mrf.mxu0
    %487 = vdwg.mxu0
    %488 = vmatpush.bf16.msra.mxu0 %v440
    %489 = vmatpush.bf16.msra.mxu0 %v436
    %490 = vmatpush.bf16.msra.mxu0 %v432
    %491 = vmatpush.bf16.msra.mxu0 %v428
    %492 = vmatpush.bf16.msra.mxu0 %v424
    %493 = vmatpush.bf16.msra.mxu0 %v420
    %494 = vmatpush.bf16.msra.mxu0 %v416
    %495 = vmatpush.bf16.msra.mxu0 %v412
    %496 = vmatmul.bf16.gmra.mxu0 0
    %v497 = vpop.f32.mrf.mxu0
    %v498 = vadd.f32 0.0, %v497
    %v499 = vpop.f32.mrf.mxu0
    %500 = vdwg.mxu0
    %501 = vmatpush.bf16.msra.mxu0 %v441
    %502 = vmatpush.bf16.msra.mxu0 %v437
    %503 = vmatpush.bf16.msra.mxu0 %v433
    %504 = vmatpush.bf16.msra.mxu0 %v429
    %505 = vmatpush.bf16.msra.mxu0 %v425
    %506 = vmatpush.bf16.msra.mxu0 %v421
    %507 = vmatpush.bf16.msra.mxu0 %v417
    %508 = vmatpush.bf16.msra.mxu0 %v413
    %509 = vmatmul.bf16.gmra.mxu0 0
    %v510 = vpop.f32.mrf.mxu0
    %v511 = vadd.f32 0.0, %v510
    %v512 = vpop.f32.mrf.mxu0
    %513 = vdwg.mxu0
    %514 = vmatpush.bf16.msra.mxu0 %v442
    %515 = vmatpush.bf16.msra.mxu0 %v438
    %516 = vmatpush.bf16.msra.mxu0 %v434
    %517 = vmatpush.bf16.msra.mxu0 %v430
    %518 = vmatpush.bf16.msra.mxu0 %v426
    %519 = vmatpush.bf16.msra.mxu0 %v422
    %520 = vmatpush.bf16.msra.mxu0 %v418
    %521 = vmatpush.bf16.msra.mxu0 %v414
    %522 = vmatmul.bf16.gmra.mxu0 0
    %v523 = vpop.f32.mrf.mxu0
    %v524 = vadd.f32 0.0, %v523
    %v525 = vpop.f32.mrf.mxu0
    %526 = vdwg.mxu0
    %v527 = vadd.f32 %v201, %v485
    %v528 = vadd.f32 %v230, %v498
    %v529 = vadd.f32 %v259, %v511
    %v530 = vadd.f32 %v288, %v524
    %v531 = vxor.u32 %v527, 2147483648
    %v532 = vmul.f32 %v531, 1.442695
    %v533 = vpow.pop %v532
    %v534 = vadd.f32 %v533, 1.0
    %v535 = vrcp.pop %v534
    %v536 = vmul.f32 %v534, %v535
    %v537 = vsub.f32 1.0, %v536
    %v538 = vmul.f32 %v535, %v537
    %v539 = vadd.f32 %v535, %v538
    %vm540 = vweird.f32 %v534
    %vm541 = vweird.f32 %v535
    %vm542 = vmor %vm540, %vm541
    %v543 = vsel %vm542, %v535, %v539
    %v544 = vand.u32 2147483647, %v534
    %vm545 = vcmp.eq.f32.partialorder %v544, 8.507059e+37
    %v546 = vand.u32 %v534, 2147483648
    %v547 = vor.u32 1.1754944e-38, %v546
    %v548 = vsel %vm545, %v547, %v543
    %v549 = vmul.f32 1.0, %v548
    %v550 = vxor.u32 %v528, 2147483648
    %v551 = vmul.f32 %v550, 1.442695
    %v552 = vpow.pop %v551
    %v553 = vadd.f32 %v552, 1.0
    %v554 = vrcp.pop %v553
    %v555 = vmul.f32 %v553, %v554
    %v556 = vsub.f32 1.0, %v555
    %v557 = vmul.f32 %v554, %v556
    %v558 = vadd.f32 %v554, %v557
    %vm559 = vweird.f32 %v553
    %vm560 = vweird.f32 %v554
    %vm561 = vmor %vm559, %vm560
    %v562 = vsel %vm561, %v554, %v558
    %v563 = vand.u32 2147483647, %v553
    %vm564 = vcmp.eq.f32.partialorder %v563, 8.507059e+37
    %v565 = vand.u32 %v553, 2147483648
    %v566 = vor.u32 1.1754944e-38, %v565
    %v567 = vsel %vm564, %v566, %v562
    %v568 = vmul.f32 1.0, %v567
    %v569 = vtanh.pop %v529
    %v570 = vxor.u32 %v530, 2147483648
    %v571 = vmul.f32 %v570, 1.442695
    %v572 = vpow.pop %v571
    %v573 = vadd.f32 %v572, 1.0
    %v574 = vrcp.pop %v573
    %v575 = vmul.f32 %v573, %v574
    %v576 = vsub.f32 1.0, %v575
    %v577 = vmul.f32 %v574, %v576
    %v578 = vadd.f32 %v574, %v577
    %vm579 = vweird.f32 %v573
    %vm580 = vweird.f32 %v574
    %vm581 = vmor %vm579, %vm580
    %v582 = vsel %vm581, %v574, %v578
    %v583 = vand.u32 2147483647, %v573
    %vm584 = vcmp.eq.f32.partialorder %v583, 8.507059e+37
    %v585 = vand.u32 %v573, 2147483648
    %v586 = vor.u32 1.1754944e-38, %v585
    %v587 = vsel %vm584, %v586, %v582
    %v588 = vmul.f32 1.0, %v587
    %v589 = vmul.f32 %v568, 0.0
    %v590 = vmul.f32 %v549, %v569
    %v591 = vadd.f32 %v589, %v590
    %v592 = vtanh.pop %v591
    %v593 = vmul.f32 %v588, %v592
    %595 = vset.pattern.permute.xlu0 0
    %596 = vperm.xlu0 %595, %v307
    %v597 = vpop.permute.xlu0 %596
    %vm599 = vcmp.gt.f32.partialorder %v597, 0.5
    %v600 = vsel %vm599, %v593, 0.0
    %v601 = vsel %vm599, %v591, 0.0
    %v602 = vpack.c.bf16 %v600, %v600
    %603 = vmatpush.bf16.msra.mxu0 %v439
    %604 = vmatpush.bf16.msra.mxu0 %v435
    %605 = vmatpush.bf16.msra.mxu0 %v431
    %606 = vmatpush.bf16.msra.mxu0 %v427
    %607 = vmatpush.bf16.msra.mxu0 %v423
    %608 = vmatpush.bf16.msra.mxu0 %v419
    %609 = vmatpush.bf16.msra.mxu0 %v415
    %610 = vmatpush.bf16.msra.mxu0 %v411
    %611 = vmatmul.bf16.gmra.mxu0 %v602
    %v612 = vpop.f32.mrf.mxu0
    %v613 = vadd.f32 0.0, %v612
    %v614 = vpop.f32.mrf.mxu0
    %615 = vdwg.mxu0
    %616 = vmatpush.bf16.msra.mxu0 %v440
    %617 = vmatpush.bf16.msra.mxu0 %v436
    %618 = vmatpush.bf16.msra.mxu0 %v432
    %619 = vmatpush.bf16.msra.mxu0 %v428
    %620 = vmatpush.bf16.msra.mxu0 %v424
    %621 = vmatpush.bf16.msra.mxu0 %v420
    %622 = vmatpush.bf16.msra.mxu0 %v416
    %623 = vmatpush.bf16.msra.mxu0 %v412
    %624 = vmatmul.bf16.gmra.mxu0 %v602
    %v625 = vpop.f32.mrf.mxu0
    %v626 = vadd.f32 0.0, %v625
    %v627 = vpop.f32.mrf.mxu0
    %628 = vdwg.mxu0
    %629 = vmatpush.bf16.msra.mxu0 %v441
    %630 = vmatpush.bf16.msra.mxu0 %v437
    %631 = vmatpush.bf16.msra.mxu0 %v433
    %632 = vmatpush.bf16.msra.mxu0 %v429
    %633 = vmatpush.bf16.msra.mxu0 %v425
    %634 = vmatpush.bf16.msra.mxu0 %v421
    %635 = vmatpush.bf16.msra.mxu0 %v417
    %636 = vmatpush.bf16.msra.mxu0 %v413
    %637 = vmatmul.bf16.gmra.mxu0 %v602
    %v638 = vpop.f32.mrf.mxu0
    %v639 = vadd.f32 0.0, %v638
    %v640 = vpop.f32.mrf.mxu0
    %641 = vdwg.mxu0
    %642 = vmatpush.bf16.msra.mxu0 %v442
    %643 = vmatpush.bf16.msra.mxu0 %v438
    %644 = vmatpush.bf16.msra.mxu0 %v434
    %645 = vmatpush.bf16.msra.mxu0 %v430
    %646 = vmatpush.bf16.msra.mxu0 %v426
    %647 = vmatpush.bf16.msra.mxu0 %v422
    %648 = vmatpush.bf16.msra.mxu0 %v418
    %649 = vmatpush.bf16.msra.mxu0 %v414
    %650 = vmatmul.bf16.gmra.mxu0 %v602
    %v651 = vpop.f32.mrf.mxu0
    %v652 = vadd.f32 0.0, %v651
    %v653 = vpop.f32.mrf.mxu0
    %654 = vdwg.mxu0
    %v655 = vadd.f32 %v203, %v613
    %v656 = vadd.f32 %v232, %v626
    %v657 = vadd.f32 %v261, %v639
    %v658 = vadd.f32 %v290, %v652
    %v659 = vxor.u32 %v655, 2147483648
    %v660 = vmul.f32 %v659, 1.442695
    %v661 = vpow.pop %v660
    %v662 = vadd.f32 %v661, 1.0
    %v663 = vrcp.pop %v662
    %v664 = vmul.f32 %v662, %v663
    %v665 = vsub.f32 1.0, %v664
    %v666 = vmul.f32 %v663, %v665
    %v667 = vadd.f32 %v663, %v666
    %vm668 = vweird.f32 %v662
    %vm669 = vweird.f32 %v663
    %vm670 = vmor %vm668, %vm669
    %v671 = vsel %vm670, %v663, %v667
    %v672 = vand.u32 2147483647, %v662
    %vm673 = vcmp.eq.f32.partialorder %v672, 8.507059e+37
    %v674 = vand.u32 %v662, 2147483648
    %v675 = vor.u32 1.1754944e-38, %v674
    %v676 = vsel %vm673, %v675, %v671
    %v677 = vmul.f32 1.0, %v676
    %v678 = vxor.u32 %v656, 2147483648
    %v679 = vmul.f32 %v678, 1.442695
    %v680 = vpow.pop %v679
    %v681 = vadd.f32 %v680, 1.0
    %v682 = vrcp.pop %v681
    %v683 = vmul.f32 %v681, %v682
    %v684 = vsub.f32 1.0, %v683
    %v685 = vmul.f32 %v682, %v684
    %v686 = vadd.f32 %v682, %v685
    %vm687 = vweird.f32 %v681
    %vm688 = vweird.f32 %v682
    %vm689 = vmor %vm687, %vm688
    %v690 = vsel %vm689, %v682, %v686
    %v691 = vand.u32 2147483647, %v681
    %vm692 = vcmp.eq.f32.partialorder %v691, 8.507059e+37
    %v693 = vand.u32 %v681, 2147483648
    %v694 = vor.u32 1.1754944e-38, %v693
    %v695 = vsel %vm692, %v694, %v690
    %v696 = vmul.f32 1.0, %v695
    %v697 = vtanh.pop %v657
    %v698 = vxor.u32 %v658, 2147483648
    %v699 = vmul.f32 %v698, 1.442695
    %v700 = vpow.pop %v699
    %v701 = vadd.f32 %v700, 1.0
    %v702 = vrcp.pop %v701
    %v703 = vmul.f32 %v701, %v702
    %v704 = vsub.f32 1.0, %v703
    %v705 = vmul.f32 %v702, %v704
    %v706 = vadd.f32 %v702, %v705
    %vm707 = vweird.f32 %v701
    %vm708 = vweird.f32 %v702
    %vm709 = vmor %vm707, %vm708
    %v710 = vsel %vm709, %v702, %v706
    %v711 = vand.u32 2147483647, %v701
    %vm712 = vcmp.eq.f32.partialorder %v711, 8.507059e+37
    %v713 = vand.u32 %v701, 2147483648
    %v714 = vor.u32 1.1754944e-38, %v713
    %v715 = vsel %vm712, %v714, %v710
    %v716 = vmul.f32 1.0, %v715
    %v717 = vmul.f32 %v696, %v601
    %v718 = vmul.f32 %v677, %v697
    %v719 = vadd.f32 %v717, %v718
    %v720 = vtanh.pop %v719
    %v721 = vmul.f32 %v716, %v720
    %723 = vset.pattern.permute.xlu0 0
    %724 = vperm.xlu0 %723, %v308
    %v725 = vpop.permute.xlu0 %724
    %vm727 = vcmp.gt.f32.partialorder %v725, 0.5
    %v728 = vsel %vm727, %v721, %v600
    %v729 = vsel %vm727, %v719, %v601
    %v730 = vpack.c.bf16 %v728, %v728
    %731 = vmatpush.bf16.msra.mxu0 %v439
    %732 = vmatpush.bf16.msra.mxu0 %v435
    %733 = vmatpush.bf16.msra.mxu0 %v431
    %734 = vmatpush.bf16.msra.mxu0 %v427
    %735 = vmatpush.bf16.msra.mxu0 %v423
    %736 = vmatpush.bf16.msra.mxu0 %v419
    %737 = vmatpush.bf16.msra.mxu0 %v415
    %738 = vmatpush.bf16.msra.mxu0 %v411
    %739 = vmatmul.bf16.gmra.mxu0 %v730
    %v740 = vpop.f32.mrf.mxu0
    %v741 = vadd.f32 0.0, %v740
    %v742 = vpop.f32.mrf.mxu0
    %743 = vdwg.mxu0
    %744 = vmatpush.bf16.msra.mxu0 %v440
    %745 = vmatpush.bf16.msra.mxu0 %v436
    %746 = vmatpush.bf16.msra.mxu0 %v432
    %747 = vmatpush.bf16.msra.mxu0 %v428
    %748 = vmatpush.bf16.msra.mxu0 %v424
    %749 = vmatpush.bf16.msra.mxu0 %v420
    %750 = vmatpush.bf16.msra.mxu0 %v416
    %751 = vmatpush.bf16.msra.mxu0 %v412
    %752 = vmatmul.bf16.gmra.mxu0 %v730
    %v753 = vpop.f32.mrf.mxu0
    %v754 = vadd.f32 0.0, %v753
    %v755 = vpop.f32.mrf.mxu0
    %756 = vdwg.mxu0
    %757 = vmatpush.bf16.msra.mxu0 %v441
    %758 = vmatpush.bf16.msra.mxu0 %v437
    %759 = vmatpush.bf16.msra.mxu0 %v433
    %760 = vmatpush.bf16.msra.mxu0 %v429
    %761 = vmatpush.bf16.msra.mxu0 %v425
    %762 = vmatpush.bf16.msra.mxu0 %v421
    %763 = vmatpush.bf16.msra.mxu0 %v417
    %764 = vmatpush.bf16.msra.mxu0 %v413
    %765 = vmatmul.bf16.gmra.mxu0 %v730
    %v766 = vpop.f32.mrf.mxu0
    %v767 = vadd.f32 0.0, %v766
    %v768 = vpop.f32.mrf.mxu0
    %769 = vdwg.mxu0
    %770 = vmatpush.bf16.msra.mxu0 %v442
    %771 = vmatpush.bf16.msra.mxu0 %v438
    %772 = vmatpush.bf16.msra.mxu0 %v434
    %773 = vmatpush.bf16.msra.mxu0 %v430
    %774 = vmatpush.bf16.msra.mxu0 %v426
    %775 = vmatpush.bf16.msra.mxu0 %v422
    %776 = vmatpush.bf16.msra.mxu0 %v418
    %777 = vmatpush.bf16.msra.mxu0 %v414
    %778 = vmatmul.bf16.gmra.mxu0 %v730
    %v779 = vpop.f32.mrf.mxu0
    %v780 = vadd.f32 0.0, %v779
    %v781 = vpop.f32.mrf.mxu0
    %782 = vdwg.mxu0
    %v783 = vadd.f32 %v206, %v741
    %v784 = vadd.f32 %v235, %v754
    %v785 = vadd.f32 %v264, %v767
    %v786 = vadd.f32 %v293, %v780
    %v787 = vxor.u32 %v783, 2147483648
    %v788 = vmul.f32 %v787, 1.442695
    %v789 = vpow.pop %v788
    %v790 = vadd.f32 %v789, 1.0
    %v791 = vrcp.pop %v790
    %v792 = vmul.f32 %v790, %v791
    %v793 = vsub.f32 1.0, %v792
    %v794 = vmul.f32 %v791, %v793
    %v795 = vadd.f32 %v791, %v794
    %vm796 = vweird.f32 %v790
    %vm797 = vweird.f32 %v791
    %vm798 = vmor %vm796, %vm797
    %v799 = vsel %vm798, %v791, %v795
    %v800 = vand.u32 2147483647, %v790
    %vm801 = vcmp.eq.f32.partialorder %v800, 8.507059e+37
    %v802 = vand.u32 %v790, 2147483648
    %v803 = vor.u32 1.1754944e-38, %v802
    %v804 = vsel %vm801, %v803, %v799
    %v805 = vmul.f32 1.0, %v804
    %v806 = vxor.u32 %v784, 2147483648
    %v807 = vmul.f32 %v806, 1.442695
    %v808 = vpow.pop %v807
    %v809 = vadd.f32 %v808, 1.0
    %v810 = vrcp.pop %v809
    %v811 = vmul.f32 %v809, %v810
    %v812 = vsub.f32 1.0, %v811
    %v813 = vmul.f32 %v810, %v812
    %v814 = vadd.f32 %v810, %v813
    %vm815 = vweird.f32 %v809
    %vm816 = vweird.f32 %v810
    %vm817 = vmor %vm815, %vm816
    %v818 = vsel %vm817, %v810, %v814
    %v819 = vand.u32 2147483647, %v809
    %vm820 = vcmp.eq.f32.partialorder %v819, 8.507059e+37
    %v821 = vand.u32 %v809, 2147483648
    %v822 = vor.u32 1.1754944e-38, %v821
    %v823 = vsel %vm820, %v822, %v818
    %v824 = vmul.f32 1.0, %v823
    %v825 = vtanh.pop %v785
    %v826 = vxor.u32 %v786, 2147483648
    %v827 = vmul.f32 %v826, 1.442695
    %v828 = vpow.pop %v827
    %v829 = vadd.f32 %v828, 1.0
    %v830 = vrcp.pop %v829
    %v831 = vmul.f32 %v829, %v830
    %v832 = vsub.f32 1.0, %v831
    %v833 = vmul.f32 %v830, %v832
    %v834 = vadd.f32 %v830, %v833
    %vm835 = vweird.f32 %v829
    %vm836 = vweird.f32 %v830
    %vm837 = vmor %vm835, %vm836
    %v838 = vsel %vm837, %v830, %v834
    %v839 = vand.u32 2147483647, %v829
    %vm840 = vcmp.eq.f32.partialorder %v839, 8.507059e+37
    %v841 = vand.u32 %v829, 2147483648
    %v842 = vor.u32 1.1754944e-38, %v841
    %v843 = vsel %vm840, %v842, %v838
    %v844 = vmul.f32 1.0, %v843
    %v845 = vmul.f32 %v824, %v729
    %v846 = vmul.f32 %v805, %v825
    %v847 = vadd.f32 %v845, %v846
    %v848 = vtanh.pop %v847
    %v849 = vmul.f32 %v844, %v848
    %851 = vset.pattern.permute.xlu0 0
    %852 = vperm.xlu0 %851, %v309
    %v853 = vpop.permute.xlu0 %852
    %vm855 = vcmp.gt.f32.partialorder %v853, 0.5
    %v856 = vsel %vm855, %v849, %v728
    %v857 = vsel %vm855, %v847, %v729
    %v858 = vpack.c.bf16 %v856, %v856
    %859 = vmatpush.bf16.msra.mxu0 %v439
    %860 = vmatpush.bf16.msra.mxu0 %v435
    %861 = vmatpush.bf16.msra.mxu0 %v431
    %862 = vmatpush.bf16.msra.mxu0 %v427
    %863 = vmatpush.bf16.msra.mxu0 %v423
    %864 = vmatpush.bf16.msra.mxu0 %v419
    %865 = vmatpush.bf16.msra.mxu0 %v415
    %866 = vmatpush.bf16.msra.mxu0 %v411
    %867 = vmatmul.bf16.gmra.mxu0 %v858
    %v868 = vpop.f32.mrf.mxu0
    %v869 = vadd.f32 0.0, %v868
    %v870 = vpop.f32.mrf.mxu0
    %871 = vdwg.mxu0
    %872 = vmatpush.bf16.msra.mxu0 %v440
    %873 = vmatpush.bf16.msra.mxu0 %v436
    %874 = vmatpush.bf16.msra.mxu0 %v432
    %875 = vmatpush.bf16.msra.mxu0 %v428
    %876 = vmatpush.bf16.msra.mxu0 %v424
    %877 = vmatpush.bf16.msra.mxu0 %v420
    %878 = vmatpush.bf16.msra.mxu0 %v416
    %879 = vmatpush.bf16.msra.mxu0 %v412
    %880 = vmatmul.bf16.gmra.mxu0 %v858
    %v881 = vpop.f32.mrf.mxu0
    %v882 = vadd.f32 0.0, %v881
    %v883 = vpop.f32.mrf.mxu0
    %884 = vdwg.mxu0
    %885 = vmatpush.bf16.msra.mxu0 %v441
    %886 = vmatpush.bf16.msra.mxu0 %v437
    %887 = vmatpush.bf16.msra.mxu0 %v433
    %888 = vmatpush.bf16.msra.mxu0 %v429
    %889 = vmatpush.bf16.msra.mxu0 %v425
    %890 = vmatpush.bf16.msra.mxu0 %v421
    %891 = vmatpush.bf16.msra.mxu0 %v417
    %892 = vmatpush.bf16.msra.mxu0 %v413
    %893 = vmatmul.bf16.gmra.mxu0 %v858
    %v894 = vpop.f32.mrf.mxu0
    %v895 = vadd.f32 0.0, %v894
    %v896 = vpop.f32.mrf.mxu0
    %897 = vdwg.mxu0
    %898 = vmatpush.bf16.msra.mxu0 %v442
    %899 = vmatpush.bf16.msra.mxu0 %v438
    %900 = vmatpush.bf16.msra.mxu0 %v434
    %901 = vmatpush.bf16.msra.mxu0 %v430
    %902 = vmatpush.bf16.msra.mxu0 %v426
    %903 = vmatpush.bf16.msra.mxu0 %v422
    %904 = vmatpush.bf16.msra.mxu0 %v418
    %905 = vmatpush.bf16.msra.mxu0 %v414
    %906 = vmatmul.bf16.gmra.mxu0 %v858
    %v907 = vpop.f32.mrf.mxu0
    %v908 = vadd.f32 0.0, %v907
    %v909 = vpop.f32.mrf.mxu0
    %910 = vdwg.mxu0
    %v911 = vadd.f32 %v208, %v869
    %v912 = vadd.f32 %v237, %v882
    %v913 = vadd.f32 %v266, %v895
    %v914 = vadd.f32 %v295, %v908
    %v915 = vxor.u32 %v911, 2147483648
    %v916 = vmul.f32 %v915, 1.442695
    %v917 = vpow.pop %v916
    %v918 = vadd.f32 %v917, 1.0
    %v919 = vrcp.pop %v918
    %v920 = vmul.f32 %v918, %v919
    %v921 = vsub.f32 1.0, %v920
    %v922 = vmul.f32 %v919, %v921
    %v923 = vadd.f32 %v919, %v922
    %vm924 = vweird.f32 %v918
    %vm925 = vweird.f32 %v919
    %vm926 = vmor %vm924, %vm925
    %v927 = vsel %vm926, %v919, %v923
    %v928 = vand.u32 2147483647, %v918
    %vm929 = vcmp.eq.f32.partialorder %v928, 8.507059e+37
    %v930 = vand.u32 %v918, 2147483648
    %v931 = vor.u32 1.1754944e-38, %v930
    %v932 = vsel %vm929, %v931, %v927
    %v933 = vmul.f32 1.0, %v932
    %v934 = vxor.u32 %v912, 2147483648
    %v935 = vmul.f32 %v934, 1.442695
    %v936 = vpow.pop %v935
    %v937 = vadd.f32 %v936, 1.0
    %v938 = vrcp.pop %v937
    %v939 = vmul.f32 %v937, %v938
    %v940 = vsub.f32 1.0, %v939
    %v941 = vmul.f32 %v938, %v940
    %v942 = vadd.f32 %v938, %v941
    %vm943 = vweird.f32 %v937
    %vm944 = vweird.f32 %v938
    %vm945 = vmor %vm943, %vm944
    %v946 = vsel %vm945, %v938, %v942
    %v947 = vand.u32 2147483647, %v937
    %vm948 = vcmp.eq.f32.partialorder %v947, 8.507059e+37
    %v949 = vand.u32 %v937, 2147483648
    %v950 = vor.u32 1.1754944e-38, %v949
    %v951 = vsel %vm948, %v950, %v946
    %v952 = vmul.f32 1.0, %v951
    %v953 = vtanh.pop %v913
    %v954 = vxor.u32 %v914, 2147483648
    %v955 = vmul.f32 %v954, 1.442695
    %v956 = vpow.pop %v955
    %v957 = vadd.f32 %v956, 1.0
    %v958 = vrcp.pop %v957
    %v959 = vmul.f32 %v957, %v958
    %v960 = vsub.f32 1.0, %v959
    %v961 = vmul.f32 %v958, %v960
    %v962 = vadd.f32 %v958, %v961
    %vm963 = vweird.f32 %v957
    %vm964 = vweird.f32 %v958
    %vm965 = vmor %vm963, %vm964
    %v966 = vsel %vm965, %v958, %v962
    %v967 = vand.u32 2147483647, %v957
    %vm968 = vcmp.eq.f32.partialorder %v967, 8.507059e+37
    %v969 = vand.u32 %v957, 2147483648
    %v970 = vor.u32 1.1754944e-38, %v969
    %v971 = vsel %vm968, %v970, %v966
    %v972 = vmul.f32 1.0, %v971
    %v973 = vmul.f32 %v952, %v857
    %v974 = vmul.f32 %v933, %v953
    %v975 = vadd.f32 %v973, %v974
    %v976 = vtanh.pop %v975
    %v977 = vmul.f32 %v972, %v976
    %979 = vset.pattern.permute.xlu0 0
    %980 = vperm.xlu0 %979, %v310
    %v981 = vpop.permute.xlu0 %980
    %vm983 = vcmp.gt.f32.partialorder %v981, 0.5
    %v984 = vsel %vm983, %v977, %v856
    %v985 = vsel %vm983, %v975, %v857
    %v986 = vpack.c.bf16 %v984, %v984
    %987 = vmatpush.bf16.msra.mxu0 %v439
    %988 = vmatpush.bf16.msra.mxu0 %v435
    %989 = vmatpush.bf16.msra.mxu0 %v431
    %990 = vmatpush.bf16.msra.mxu0 %v427
    %991 = vmatpush.bf16.msra.mxu0 %v423
    %992 = vmatpush.bf16.msra.mxu0 %v419
    %993 = vmatpush.bf16.msra.mxu0 %v415
    %994 = vmatpush.bf16.msra.mxu0 %v411
    %995 = vmatmul.bf16.gmra.mxu0 %v986
    %v996 = vpop.f32.mrf.mxu0
    %v997 = vadd.f32 0.0, %v996
    %v998 = vpop.f32.mrf.mxu0
    %999 = vdwg.mxu0
    %1000 = vmatpush.bf16.msra.mxu0 %v440
    %1001 = vmatpush.bf16.msra.mxu0 %v436
    %1002 = vmatpush.bf16.msra.mxu0 %v432
    %1003 = vmatpush.bf16.msra.mxu0 %v428
    %1004 = vmatpush.bf16.msra.mxu0 %v424
    %1005 = vmatpush.bf16.msra.mxu0 %v420
    %1006 = vmatpush.bf16.msra.mxu0 %v416
    %1007 = vmatpush.bf16.msra.mxu0 %v412
    %1008 = vmatmul.bf16.gmra.mxu0 %v986
    %v1009 = vpop.f32.mrf.mxu0
    %v1010 = vadd.f32 0.0, %v1009
    %v1011 = vpop.f32.mrf.mxu0
    %1012 = vdwg.mxu0
    %1013 = vmatpush.bf16.msra.mxu0 %v441
    %1014 = vmatpush.bf16.msra.mxu0 %v437
    %1015 = vmatpush.bf16.msra.mxu0 %v433
    %1016 = vmatpush.bf16.msra.mxu0 %v429
    %1017 = vmatpush.bf16.msra.mxu0 %v425
    %1018 = vmatpush.bf16.msra.mxu0 %v421
    %1019 = vmatpush.bf16.msra.mxu0 %v417
    %1020 = vmatpush.bf16.msra.mxu0 %v413
    %1021 = vmatmul.bf16.gmra.mxu0 %v986
    %v1022 = vpop.f32.mrf.mxu0
    %v1023 = vadd.f32 0.0, %v1022
    %v1024 = vpop.f32.mrf.mxu0
    %1025 = vdwg.mxu0
    %1026 = vmatpush.bf16.msra.mxu0 %v442
    %1027 = vmatpush.bf16.msra.mxu0 %v438
    %1028 = vmatpush.bf16.msra.mxu0 %v434
    %1029 = vmatpush.bf16.msra.mxu0 %v430
    %1030 = vmatpush.bf16.msra.mxu0 %v426
    %1031 = vmatpush.bf16.msra.mxu0 %v422
    %1032 = vmatpush.bf16.msra.mxu0 %v418
    %1033 = vmatpush.bf16.msra.mxu0 %v414
    %1034 = vmatmul.bf16.gmra.mxu0 %v986
    %v1035 = vpop.f32.mrf.mxu0
    %v1036 = vadd.f32 0.0, %v1035
    %v1037 = vpop.f32.mrf.mxu0
    %1038 = vdwg.mxu0
    %v1039 = vadd.f32 %v211, %v997
    %v1040 = vadd.f32 %v240, %v1010
    %v1041 = vadd.f32 %v269, %v1023
    %v1042 = vadd.f32 %v298, %v1036
    %v1043 = vxor.u32 %v1039, 2147483648
    %v1044 = vmul.f32 %v1043, 1.442695
    %v1045 = vpow.pop %v1044
    %v1046 = vadd.f32 %v1045, 1.0
    %v1047 = vrcp.pop %v1046
    %v1048 = vmul.f32 %v1046, %v1047
    %v1049 = vsub.f32 1.0, %v1048
    %v1050 = vmul.f32 %v1047, %v1049
    %v1051 = vadd.f32 %v1047, %v1050
    %vm1052 = vweird.f32 %v1046
    %vm1053 = vweird.f32 %v1047
    %vm1054 = vmor %vm1052, %vm1053
    %v1055 = vsel %vm1054, %v1047, %v1051
    %v1056 = vand.u32 2147483647, %v1046
    %vm1057 = vcmp.eq.f32.partialorder %v1056, 8.507059e+37
    %v1058 = vand.u32 %v1046, 2147483648
    %v1059 = vor.u32 1.1754944e-38, %v1058
    %v1060 = vsel %vm1057, %v1059, %v1055
    %v1061 = vmul.f32 1.0, %v1060
    %v1062 = vxor.u32 %v1040, 2147483648
    %v1063 = vmul.f32 %v1062, 1.442695
    %v1064 = vpow.pop %v1063
    %v1065 = vadd.f32 %v1064, 1.0
    %v1066 = vrcp.pop %v1065
    %v1067 = vmul.f32 %v1065, %v1066
    %v1068 = vsub.f32 1.0, %v1067
    %v1069 = vmul.f32 %v1066, %v1068
    %v1070 = vadd.f32 %v1066, %v1069
    %vm1071 = vweird.f32 %v1065
    %vm1072 = vweird.f32 %v1066
    %vm1073 = vmor %vm1071, %vm1072
    %v1074 = vsel %vm1073, %v1066, %v1070
    %v1075 = vand.u32 2147483647, %v1065
    %vm1076 = vcmp.eq.f32.partialorder %v1075, 8.507059e+37
    %v1077 = vand.u32 %v1065, 2147483648
    %v1078 = vor.u32 1.1754944e-38, %v1077
    %v1079 = vsel %vm1076, %v1078, %v1074
    %v1080 = vmul.f32 1.0, %v1079
    %v1081 = vtanh.pop %v1041
    %v1082 = vxor.u32 %v1042, 2147483648
    %v1083 = vmul.f32 %v1082, 1.442695
    %v1084 = vpow.pop %v1083
    %v1085 = vadd.f32 %v1084, 1.0
    %v1086 = vrcp.pop %v1085
    %v1087 = vmul.f32 %v1085, %v1086
    %v1088 = vsub.f32 1.0, %v1087
    %v1089 = vmul.f32 %v1086, %v1088
    %v1090 = vadd.f32 %v1086, %v1089
    %vm1091 = vweird.f32 %v1085
    %vm1092 = vweird.f32 %v1086
    %vm1093 = vmor %vm1091, %vm1092
    %v1094 = vsel %vm1093, %v1086, %v1090
    %v1095 = vand.u32 2147483647, %v1085
    %vm1096 = vcmp.eq.f32.partialorder %v1095, 8.507059e+37
    %v1097 = vand.u32 %v1085, 2147483648
    %v1098 = vor.u32 1.1754944e-38, %v1097
    %v1099 = vsel %vm1096, %v1098, %v1094
    %v1100 = vmul.f32 1.0, %v1099
    %v1101 = vmul.f32 %v1080, %v985
    %v1102 = vmul.f32 %v1061, %v1081
    %v1103 = vadd.f32 %v1101, %v1102
    %v1104 = vtanh.pop %v1103
    %v1105 = vmul.f32 %v1100, %v1104
    %1107 = vset.pattern.permute.xlu0 0
    %1108 = vperm.xlu0 %1107, %v311
    %v1109 = vpop.permute.xlu0 %1108
    %vm1111 = vcmp.gt.f32.partialorder %v1109, 0.5
    %v1112 = vsel %vm1111, %v1105, %v984
    %v1113 = vsel %vm1111, %v1103, %v985
    %v1114 = vpack.c.bf16 %v1112, %v1112
    %1115 = vmatpush.bf16.msra.mxu0 %v439
    %1116 = vmatpush.bf16.msra.mxu0 %v435
    %1117 = vmatpush.bf16.msra.mxu0 %v431
    %1118 = vmatpush.bf16.msra.mxu0 %v427
    %1119 = vmatpush.bf16.msra.mxu0 %v423
    %1120 = vmatpush.bf16.msra.mxu0 %v419
    %1121 = vmatpush.bf16.msra.mxu0 %v415
    %1122 = vmatpush.bf16.msra.mxu0 %v411
    %1123 = vmatmul.bf16.gmra.mxu0 %v1114
    %v1124 = vpop.f32.mrf.mxu0
    %v1125 = vadd.f32 0.0, %v1124
    %v1126 = vpop.f32.mrf.mxu0
    %1127 = vdwg.mxu0
    %1128 = vmatpush.bf16.msra.mxu0 %v440
    %1129 = vmatpush.bf16.msra.mxu0 %v436
    %1130 = vmatpush.bf16.msra.mxu0 %v432
    %1131 = vmatpush.bf16.msra.mxu0 %v428
    %1132 = vmatpush.bf16.msra.mxu0 %v424
    %1133 = vmatpush.bf16.msra.mxu0 %v420
    %1134 = vmatpush.bf16.msra.mxu0 %v416
    %1135 = vmatpush.bf16.msra.mxu0 %v412
    %1136 = vmatmul.bf16.gmra.mxu0 %v1114
    %v1137 = vpop.f32.mrf.mxu0
    %v1138 = vadd.f32 0.0, %v1137
    %v1139 = vpop.f32.mrf.mxu0
    %1140 = vdwg.mxu0
    %1141 = vmatpush.bf16.msra.mxu0 %v441
    %1142 = vmatpush.bf16.msra.mxu0 %v437
    %1143 = vmatpush.bf16.msra.mxu0 %v433
    %1144 = vmatpush.bf16.msra.mxu0 %v429
    %1145 = vmatpush.bf16.msra.mxu0 %v425
    %1146 = vmatpush.bf16.msra.mxu0 %v421
    %1147 = vmatpush.bf16.msra.mxu0 %v417
    %1148 = vmatpush.bf16.msra.mxu0 %v413
    %1149 = vmatmul.bf16.gmra.mxu0 %v1114
    %v1150 = vpop.f32.mrf.mxu0
    %v1151 = vadd.f32 0.0, %v1150
    %v1152 = vpop.f32.mrf.mxu0
    %1153 = vdwg.mxu0
    %1154 = vmatpush.bf16.msra.mxu0 %v442
    %1155 = vmatpush.bf16.msra.mxu0 %v438
    %1156 = vmatpush.bf16.msra.mxu0 %v434
    %1157 = vmatpush.bf16.msra.mxu0 %v430
    %1158 = vmatpush.bf16.msra.mxu0 %v426
    %1159 = vmatpush.bf16.msra.mxu0 %v422
    %1160 = vmatpush.bf16.msra.mxu0 %v418
    %1161 = vmatpush.bf16.msra.mxu0 %v414
    %1162 = vmatmul.bf16.gmra.mxu0 %v1114
    %v1163 = vpop.f32.mrf.mxu0
    %v1164 = vadd.f32 0.0, %v1163
    %v1165 = vpop.f32.mrf.mxu0
    %1166 = vdwg.mxu0
    %v1167 = vadd.f32 %v213, %v1125
    %v1168 = vadd.f32 %v242, %v1138
    %v1169 = vadd.f32 %v271, %v1151
    %v1170 = vadd.f32 %v300, %v1164
    %v1171 = vxor.u32 %v1167, 2147483648
    %v1172 = vmul.f32 %v1171, 1.442695
    %v1173 = vpow.pop %v1172
    %v1174 = vadd.f32 %v1173, 1.0
    %v1175 = vrcp.pop %v1174
    %v1176 = vmul.f32 %v1174, %v1175
    %v1177 = vsub.f32 1.0, %v1176
    %v1178 = vmul.f32 %v1175, %v1177
    %v1179 = vadd.f32 %v1175, %v1178
    %vm1180 = vweird.f32 %v1174
    %vm1181 = vweird.f32 %v1175
    %vm1182 = vmor %vm1180, %vm1181
    %v1183 = vsel %vm1182, %v1175, %v1179
    %v1184 = vand.u32 2147483647, %v1174
    %vm1185 = vcmp.eq.f32.partialorder %v1184, 8.507059e+37
    %v1186 = vand.u32 %v1174, 2147483648
    %v1187 = vor.u32 1.1754944e-38, %v1186
    %v1188 = vsel %vm1185, %v1187, %v1183
    %v1189 = vmul.f32 1.0, %v1188
    %v1190 = vxor.u32 %v1168, 2147483648
    %v1191 = vmul.f32 %v1190, 1.442695
    %v1192 = vpow.pop %v1191
    %v1193 = vadd.f32 %v1192, 1.0
    %v1194 = vrcp.pop %v1193
    %v1195 = vmul.f32 %v1193, %v1194
    %v1196 = vsub.f32 1.0, %v1195
    %v1197 = vmul.f32 %v1194, %v1196
    %v1198 = vadd.f32 %v1194, %v1197
    %vm1199 = vweird.f32 %v1193
    %vm1200 = vweird.f32 %v1194
    %vm1201 = vmor %vm1199, %vm1200
    %v1202 = vsel %vm1201, %v1194, %v1198
    %v1203 = vand.u32 2147483647, %v1193
    %vm1204 = vcmp.eq.f32.partialorder %v1203, 8.507059e+37
    %v1205 = vand.u32 %v1193, 2147483648
    %v1206 = vor.u32 1.1754944e-38, %v1205
    %v1207 = vsel %vm1204, %v1206, %v1202
    %v1208 = vmul.f32 1.0, %v1207
    %v1209 = vtanh.pop %v1169
    %v1210 = vxor.u32 %v1170, 2147483648
    %v1211 = vmul.f32 %v1210, 1.442695
    %v1212 = vpow.pop %v1211
    %v1213 = vadd.f32 %v1212, 1.0
    %v1214 = vrcp.pop %v1213
    %v1215 = vmul.f32 %v1213, %v1214
    %v1216 = vsub.f32 1.0, %v1215
    %v1217 = vmul.f32 %v1214, %v1216
    %v1218 = vadd.f32 %v1214, %v1217
    %vm1219 = vweird.f32 %v1213
    %vm1220 = vweird.f32 %v1214
    %vm1221 = vmor %vm1219, %vm1220
    %v1222 = vsel %vm1221, %v1214, %v1218
    %v1223 = vand.u32 2147483647, %v1213
    %vm1224 = vcmp.eq.f32.partialorder %v1223, 8.507059e+37
    %v1225 = vand.u32 %v1213, 2147483648
    %v1226 = vor.u32 1.1754944e-38, %v1225
    %v1227 = vsel %vm1224, %v1226, %v1222
    %v1228 = vmul.f32 1.0, %v1227
    %v1229 = vmul.f32 %v1208, %v1113
    %v1230 = vmul.f32 %v1189, %v1209
    %v1231 = vadd.f32 %v1229, %v1230
    %v1232 = vtanh.pop %v1231
    %v1233 = vmul.f32 %v1228, %v1232
    %1235 = vset.pattern.permute.xlu0 0
    %1236 = vperm.xlu0 %1235, %v312
    %v1237 = vpop.permute.xlu0 %1236
    %vm1239 = vcmp.gt.f32.partialorder %v1237, 0.5
    %v1240 = vsel %vm1239, %v1233, %v1112
    %v1241 = vsel %vm1239, %v1231, %v1113
    %v1242 = vpack.c.bf16 %v1240, %v1240
    %1243 = vmatpush.bf16.msra.mxu0 %v439
    %1244 = vmatpush.bf16.msra.mxu0 %v435
    %1245 = vmatpush.bf16.msra.mxu0 %v431
    %1246 = vmatpush.bf16.msra.mxu0 %v427
    %1247 = vmatpush.bf16.msra.mxu0 %v423
    %1248 = vmatpush.bf16.msra.mxu0 %v419
    %1249 = vmatpush.bf16.msra.mxu0 %v415
    %1250 = vmatpush.bf16.msra.mxu0 %v411
    %1251 = vmatmul.bf16.gmra.mxu0 %v1242
    %v1252 = vpop.f32.mrf.mxu0
    %v1253 = vadd.f32 0.0, %v1252
    %v1254 = vpop.f32.mrf.mxu0
    %1255 = vdwg.mxu0
    %1256 = vmatpush.bf16.msra.mxu0 %v440
    %1257 = vmatpush.bf16.msra.mxu0 %v436
    %1258 = vmatpush.bf16.msra.mxu0 %v432
    %1259 = vmatpush.bf16.msra.mxu0 %v428
    %1260 = vmatpush.bf16.msra.mxu0 %v424
    %1261 = vmatpush.bf16.msra.mxu0 %v420
    %1262 = vmatpush.bf16.msra.mxu0 %v416
    %1263 = vmatpush.bf16.msra.mxu0 %v412
    %1264 = vmatmul.bf16.gmra.mxu0 %v1242
    %v1265 = vpop.f32.mrf.mxu0
    %v1266 = vadd.f32 0.0, %v1265
    %v1267 = vpop.f32.mrf.mxu0
    %1268 = vdwg.mxu0
    %1269 = vmatpush.bf16.msra.mxu0 %v441
    %1270 = vmatpush.bf16.msra.mxu0 %v437
    %1271 = vmatpush.bf16.msra.mxu0 %v433
    %1272 = vmatpush.bf16.msra.mxu0 %v429
    %1273 = vmatpush.bf16.msra.mxu0 %v425
    %1274 = vmatpush.bf16.msra.mxu0 %v421
    %1275 = vmatpush.bf16.msra.mxu0 %v417
    %1276 = vmatpush.bf16.msra.mxu0 %v413
    %1277 = vmatmul.bf16.gmra.mxu0 %v1242
    %v1278 = vpop.f32.mrf.mxu0
    %v1279 = vadd.f32 0.0, %v1278
    %v1280 = vpop.f32.mrf.mxu0
    %1281 = vdwg.mxu0
    %1282 = vmatpush.bf16.msra.mxu0 %v442
    %1283 = vmatpush.bf16.msra.mxu0 %v438
    %1284 = vmatpush.bf16.msra.mxu0 %v434
    %1285 = vmatpush.bf16.msra.mxu0 %v430
    %1286 = vmatpush.bf16.msra.mxu0 %v426
    %1287 = vmatpush.bf16.msra.mxu0 %v422
    %1288 = vmatpush.bf16.msra.mxu0 %v418
    %1289 = vmatpush.bf16.msra.mxu0 %v414
    %1290 = vmatmul.bf16.gmra.mxu0 %v1242
    %v1291 = vpop.f32.mrf.mxu0
    %v1292 = vadd.f32 0.0, %v1291
    %v1293 = vpop.f32.mrf.mxu0
    %1294 = vdwg.mxu0
    %v1295 = vadd.f32 %v216, %v1253
    %v1296 = vadd.f32 %v245, %v1266
    %v1297 = vadd.f32 %v274, %v1279
    %v1298 = vadd.f32 %v303, %v1292
    %v1299 = vxor.u32 %v1295, 2147483648
    %v1300 = vmul.f32 %v1299, 1.442695
    %v1301 = vpow.pop %v1300
    %v1302 = vadd.f32 %v1301, 1.0
    %v1303 = vrcp.pop %v1302
    %v1304 = vmul.f32 %v1302, %v1303
    %v1305 = vsub.f32 1.0, %v1304
    %v1306 = vmul.f32 %v1303, %v1305
    %v1307 = vadd.f32 %v1303, %v1306
    %vm1308 = vweird.f32 %v1302
    %vm1309 = vweird.f32 %v1303
    %vm1310 = vmor %vm1308, %vm1309
    %v1311 = vsel %vm1310, %v1303, %v1307
    %v1312 = vand.u32 2147483647, %v1302
    %vm1313 = vcmp.eq.f32.partialorder %v1312, 8.507059e+37
    %v1314 = vand.u32 %v1302, 2147483648
    %v1315 = vor.u32 1.1754944e-38, %v1314
    %v1316 = vsel %vm1313, %v1315, %v1311
    %v1317 = vmul.f32 1.0, %v1316
    %v1318 = vxor.u32 %v1296, 2147483648
    %v1319 = vmul.f32 %v1318, 1.442695
    %v1320 = vpow.pop %v1319
    %v1321 = vadd.f32 %v1320, 1.0
    %v1322 = vrcp.pop %v1321
    %v1323 = vmul.f32 %v1321, %v1322
    %v1324 = vsub.f32 1.0, %v1323
    %v1325 = vmul.f32 %v1322, %v1324
    %v1326 = vadd.f32 %v1322, %v1325
    %vm1327 = vweird.f32 %v1321
    %vm1328 = vweird.f32 %v1322
    %vm1329 = vmor %vm1327, %vm1328
    %v1330 = vsel %vm1329, %v1322, %v1326
    %v1331 = vand.u32 2147483647, %v1321
    %vm1332 = vcmp.eq.f32.partialorder %v1331, 8.507059e+37
    %v1333 = vand.u32 %v1321, 2147483648
    %v1334 = vor.u32 1.1754944e-38, %v1333
    %v1335 = vsel %vm1332, %v1334, %v1330
    %v1336 = vmul.f32 1.0, %v1335
    %v1337 = vtanh.pop %v1297
    %v1338 = vxor.u32 %v1298, 2147483648
    %v1339 = vmul.f32 %v1338, 1.442695
    %v1340 = vpow.pop %v1339
    %v1341 = vadd.f32 %v1340, 1.0
    %v1342 = vrcp.pop %v1341
    %v1343 = vmul.f32 %v1341, %v1342
    %v1344 = vsub.f32 1.0, %v1343
    %v1345 = vmul.f32 %v1342, %v1344
    %v1346 = vadd.f32 %v1342, %v1345
    %vm1347 = vweird.f32 %v1341
    %vm1348 = vweird.f32 %v1342
    %vm1349 = vmor %vm1347, %vm1348
    %v1350 = vsel %vm1349, %v1342, %v1346
    %v1351 = vand.u32 2147483647, %v1341
    %vm1352 = vcmp.eq.f32.partialorder %v1351, 8.507059e+37
    %v1353 = vand.u32 %v1341, 2147483648
    %v1354 = vor.u32 1.1754944e-38, %v1353
    %v1355 = vsel %vm1352, %v1354, %v1350
    %v1356 = vmul.f32 1.0, %v1355
    %v1357 = vmul.f32 %v1336, %v1241
    %v1358 = vmul.f32 %v1317, %v1337
    %v1359 = vadd.f32 %v1357, %v1358
    %v1360 = vtanh.pop %v1359
    %v1361 = vmul.f32 %v1356, %v1360
    %1363 = vset.pattern.permute.xlu0 0
    %1364 = vperm.xlu0 %1363, %v313
    %v1365 = vpop.permute.xlu0 %1364
    %vm1367 = vcmp.gt.f32.partialorder %v1365, 0.5
    %v1368 = vsel %vm1367, %v1361, %v1240
    %v1369 = vsel %vm1367, %v1359, %v1241
    %v1370 = vpack.c.bf16 %v1368, %v1368
    %1371 = vmatpush.bf16.msra.mxu0 %v439
    %1372 = vmatpush.bf16.msra.mxu0 %v435
    %1373 = vmatpush.bf16.msra.mxu0 %v431
    %1374 = vmatpush.bf16.msra.mxu0 %v427
    %1375 = vmatpush.bf16.msra.mxu0 %v423
    %1376 = vmatpush.bf16.msra.mxu0 %v419
    %1377 = vmatpush.bf16.msra.mxu0 %v415
    %1378 = vmatpush.bf16.msra.mxu0 %v411
    %1379 = vmatmul.bf16.gmra.mxu0 %v1370
    %v1380 = vpop.f32.mrf.mxu0
    %v1381 = vadd.f32 0.0, %v1380
    %v1382 = vpop.f32.mrf.mxu0
    %1383 = vdwg.mxu0
    %1384 = vmatpush.bf16.msra.mxu0 %v440
    %1385 = vmatpush.bf16.msra.mxu0 %v436
    %1386 = vmatpush.bf16.msra.mxu0 %v432
    %1387 = vmatpush.bf16.msra.mxu0 %v428
    %1388 = vmatpush.bf16.msra.mxu0 %v424
    %1389 = vmatpush.bf16.msra.mxu0 %v420
    %1390 = vmatpush.bf16.msra.mxu0 %v416
    %1391 = vmatpush.bf16.msra.mxu0 %v412
    %1392 = vmatmul.bf16.gmra.mxu0 %v1370
    %v1393 = vpop.f32.mrf.mxu0
    %v1394 = vadd.f32 0.0, %v1393
    %v1395 = vpop.f32.mrf.mxu0
    %1396 = vdwg.mxu0
    %1397 = vmatpush.bf16.msra.mxu0 %v441
    %1398 = vmatpush.bf16.msra.mxu0 %v437
    %1399 = vmatpush.bf16.msra.mxu0 %v433
    %1400 = vmatpush.bf16.msra.mxu0 %v429
    %1401 = vmatpush.bf16.msra.mxu0 %v425
    %1402 = vmatpush.bf16.msra.mxu0 %v421
    %1403 = vmatpush.bf16.msra.mxu0 %v417
    %1404 = vmatpush.bf16.msra.mxu0 %v413
    %1405 = vmatmul.bf16.gmra.mxu0 %v1370
    %v1406 = vpop.f32.mrf.mxu0
    %v1407 = vadd.f32 0.0, %v1406
    %v1408 = vpop.f32.mrf.mxu0
    %1409 = vdwg.mxu0
    %1410 = vmatpush.bf16.msra.mxu0 %v442
    %1411 = vmatpush.bf16.msra.mxu0 %v438
    %1412 = vmatpush.bf16.msra.mxu0 %v434
    %1413 = vmatpush.bf16.msra.mxu0 %v430
    %1414 = vmatpush.bf16.msra.mxu0 %v426
    %1415 = vmatpush.bf16.msra.mxu0 %v422
    %1416 = vmatpush.bf16.msra.mxu0 %v418
    %1417 = vmatpush.bf16.msra.mxu0 %v414
    %1418 = vmatmul.bf16.gmra.mxu0 %v1370
    %v1419 = vpop.f32.mrf.mxu0
    %v1420 = vadd.f32 0.0, %v1419
    %v1421 = vpop.f32.mrf.mxu0
    %1422 = vdwg.mxu0
    %v1423 = vadd.f32 %v218, %v1381
    %v1424 = vadd.f32 %v247, %v1394
    %v1425 = vadd.f32 %v276, %v1407
    %v1426 = vadd.f32 %v305, %v1420
    %v1427 = vxor.u32 %v1423, 2147483648
    %v1428 = vmul.f32 %v1427, 1.442695
    %v1429 = vpow.pop %v1428
    %v1430 = vadd.f32 %v1429, 1.0
    %v1431 = vrcp.pop %v1430
    %v1432 = vmul.f32 %v1430, %v1431
    %v1433 = vsub.f32 1.0, %v1432
    %v1434 = vmul.f32 %v1431, %v1433
    %v1435 = vadd.f32 %v1431, %v1434
    %vm1436 = vweird.f32 %v1430
    %vm1437 = vweird.f32 %v1431
    %vm1438 = vmor %vm1436, %vm1437
    %v1439 = vsel %vm1438, %v1431, %v1435
    %v1440 = vand.u32 2147483647, %v1430
    %vm1441 = vcmp.eq.f32.partialorder %v1440, 8.507059e+37
    %v1442 = vand.u32 %v1430, 2147483648
    %v1443 = vor.u32 1.1754944e-38, %v1442
    %v1444 = vsel %vm1441, %v1443, %v1439
    %v1445 = vmul.f32 1.0, %v1444
    %v1446 = vxor.u32 %v1424, 2147483648
    %v1447 = vmul.f32 %v1446, 1.442695
    %v1448 = vpow.pop %v1447
    %v1449 = vadd.f32 %v1448, 1.0
    %v1450 = vrcp.pop %v1449
    %v1451 = vmul.f32 %v1449, %v1450
    %v1452 = vsub.f32 1.0, %v1451
    %v1453 = vmul.f32 %v1450, %v1452
    %v1454 = vadd.f32 %v1450, %v1453
    %vm1455 = vweird.f32 %v1449
    %vm1456 = vweird.f32 %v1450
    %vm1457 = vmor %vm1455, %vm1456
    %v1458 = vsel %vm1457, %v1450, %v1454
    %v1459 = vand.u32 2147483647, %v1449
    %vm1460 = vcmp.eq.f32.partialorder %v1459, 8.507059e+37
    %v1461 = vand.u32 %v1449, 2147483648
    %v1462 = vor.u32 1.1754944e-38, %v1461
    %v1463 = vsel %vm1460, %v1462, %v1458
    %v1464 = vmul.f32 1.0, %v1463
    %v1465 = vtanh.pop %v1425
    %v1466 = vxor.u32 %v1426, 2147483648
    %v1467 = vmul.f32 %v1466, 1.442695
    %v1468 = vpow.pop %v1467
    %v1469 = vadd.f32 %v1468, 1.0
    %v1470 = vrcp.pop %v1469
    %v1471 = vmul.f32 %v1469, %v1470
    %v1472 = vsub.f32 1.0, %v1471
    %v1473 = vmul.f32 %v1470, %v1472
    %v1474 = vadd.f32 %v1470, %v1473
    %vm1475 = vweird.f32 %v1469
    %vm1476 = vweird.f32 %v1470
    %vm1477 = vmor %vm1475, %vm1476
    %v1478 = vsel %vm1477, %v1470, %v1474
    %v1479 = vand.u32 2147483647, %v1469
    %vm1480 = vcmp.eq.f32.partialorder %v1479, 8.507059e+37
    %v1481 = vand.u32 %v1469, 2147483648
    %v1482 = vor.u32 1.1754944e-38, %v1481
    %v1483 = vsel %vm1480, %v1482, %v1478
    %v1484 = vmul.f32 1.0, %v1483
    %v1485 = vmul.f32 %v1464, %v1369
    %v1486 = vmul.f32 %v1445, %v1465
    %v1487 = vadd.f32 %v1485, %v1486
    %v1488 = vtanh.pop %v1487
    %v1489 = vmul.f32 %v1484, %v1488
    %1491 = vset.pattern.permute.xlu0 0
    %1492 = vperm.xlu0 %1491, %v314
    %v1493 = vpop.permute.xlu0 %1492
    %vm1495 = vcmp.gt.f32.partialorder %v1493, 0.5
    %v1496 = vsel %vm1495, %v1489, %v1368
    %v1497 = vpack.c.bf16 %v1496, %v1496
    %v1498 = vld [vmem:[#allocation5] sm:$0xf]
    %v1499 = vld [vmem:[#allocation5 + $0x4] sm:$0xf]
    %v1500 = vld [vmem:[#allocation5 + $0x8] sm:$0xf]
    %v1501 = vld [vmem:[#allocation5 + $0xc] sm:$0xf]
    %v1502 = vld [vmem:[#allocation5 + $0x10] sm:$0xf]
    %v1503 = vld [vmem:[#allocation5 + $0x14] sm:$0xf]
    %v1504 = vld [vmem:[#allocation5 + $0x18] sm:$0xf]
    %v1505 = vld [vmem:[#allocation5 + $0x1c] sm:$0xf]
    %v1506 = vld [vmem:[#allocation5 + $0x20] sm:$0xf]
    %v1507 = vld [vmem:[#allocation5 + $0x24] sm:$0xf]
    %v1508 = vld [vmem:[#allocation5 + $0x28] sm:$0xf]
    %v1509 = vld [vmem:[#allocation5 + $0x2c] sm:$0xf]
    %v1510 = vld [vmem:[#allocation5 + $0x30] sm:$0xf]
    %v1511 = vld [vmem:[#allocation5 + $0x34] sm:$0xf]
    %v1512 = vld [vmem:[#allocation5 + $0x38] sm:$0xf]
    %v1513 = vld [vmem:[#allocation5 + $0x3c] sm:$0xf]
    %v1514 = vld [vmem:[%s6] sm:$0x1]
    %v1516 = vperm.slane %v1514, 0
    %v1534 = vunpack.c.l.b16 %v1498
    %v1535 = vunpack.c.l.b16 %v1499
    %v1536 = vunpack.c.l.b16 %v1500
    %v1537 = vunpack.c.l.b16 %v1501
    %v1538 = vunpack.c.l.b16 %v1502
    %v1539 = vunpack.c.l.b16 %v1503
    %v1540 = vunpack.c.l.b16 %v1504
    %v1541 = vunpack.c.l.b16 %v1505
    %v1542 = vunpack.c.l.b16 %v1506
    %v1543 = vunpack.c.l.b16 %v1507
    %v1544 = vunpack.c.l.b16 %v1508
    %v1545 = vunpack.c.l.b16 %v1509
    %v1546 = vunpack.c.l.b16 %v1510
    %v1547 = vunpack.c.l.b16 %v1511
    %v1548 = vunpack.c.l.b16 %v1512
    %v1549 = vunpack.c.l.b16 %v1513
    %v1550 = vpack.c.b16 %v1535, %v1534
    %v1551 = vpack.c.b16 %v1537, %v1536
    %v1552 = vpack.c.b16 %v1539, %v1538
    %v1553 = vpack.c.b16 %v1541, %v1540
    %v1554 = vpack.c.b16 %v1543, %v1542
    %v1555 = vpack.c.b16 %v1545, %v1544
    %v1556 = vpack.c.b16 %v1547, %v1546
    %v1557 = vpack.c.b16 %v1549, %v1548
    %1566 = vmatpush.bf16.msra.mxu0 %v1557
    %1567 = vmatpush.bf16.msra.mxu0 %v1556
    %1568 = vmatpush.bf16.msra.mxu0 %v1555
    %1569 = vmatpush.bf16.msra.mxu0 %v1554
    %1570 = vmatpush.bf16.msra.mxu0 %v1553
    %1571 = vmatpush.bf16.msra.mxu0 %v1552
    %1572 = vmatpush.bf16.msra.mxu0 %v1551
    %1573 = vmatpush.bf16.msra.mxu0 %v1550
    %1574 = vmatmul.bf16.gmra.mxu0 %v1497
    %v1575 = vpop.f32.mrf.mxu0
    %v1576 = vadd.f32 %v1516, %v1575
    %v1577 = vpop.f32.mrf.mxu0
    %1578 = vdwg.mxu0
    %1579 = vst [vmem:[#allocation7] sm:$0xff] %v1576
    // Predicated region
    $region38: #{tpu_custom_call.1} parent=1 // pred_check
      _
    $region39: #{tpu_custom_call.1} parent=1 // pred_check_branch
      %1581 = sbr.rel (0) target = $region41
    $region40: #{tpu_custom_call.1} parent=1 // pred_region
      %1583 = vsyncadd [#allocation4], 0
      %s1585 = sshll.u32 [#allocation7], 4
      %s1586 = int_to_ptr.vmem [resolvable:$true] %s1585
      %s1587 = sshll.u32 %s7, 4
      %s1588 = int_to_ptr.hbm [resolvable:$true] %s1587
      %1590 = dma.vmem_to_hbm [thread:$0]  %s1586, 128, %s1588, [#allocation4]
    $region41: #{tpu_custom_call.1} parent=1 // pred_fallthru
      _
    // Predicated region
    $region42: #{tpu_custom_call.1} parent=1 // pred_check
      _
    $region43: #{tpu_custom_call.1} parent=1 // pred_check_branch
      %1592 = sbr.rel (0) target = $region45
    $region44: #{tpu_custom_call.1} parent=1 // pred_region
      %1594 = dma.done [#allocation4], 128
    $region45: #{tpu_custom_call.1} parent=1 // pred_fallthru
      _
    %1595 = vsyncpa [#allocation3], 1
    %1596 = vsyncpa [#allocation6], 1
    %1597 = vsyncpa [#allocation4], 1

</llo_original>
